<compile_context>
chip_gen: v7x
topology: tpu7x:2x2x1
jax: 0.10.0
libtpu: 0.0.40
codegen_flags: <defaults>
</compile_context>

<pallas_src>
import functools

import jax
import jax.numpy as jnp
from jax import lax
from jax.experimental import pallas as pl
from jax.experimental.pallas import tpu as pltpu


# ------------------------------- kernel ------------------------------------

def _sparse_ae_kernel(lamb_ref, x_ref, we_ref, be_ref, wd_ref, bd_ref,
                      rec_ref, sparse_ref, sp_bf16_ref):
    """One batch tile: encoder matmul -> complex soft-threshold -> decoder matmul."""
    lam = jnp.abs(lamb_ref[0])

    # Encoder: [TM, D] @ [D, D], bf16 operands, f32 MXU accumulation.
    latent = (jnp.dot(x_ref[...].astype(jnp.bfloat16), we_ref[...],
                      preferred_element_type=jnp.float32)
              + be_ref[...])

    # Complex soft-threshold: scale = relu(1 - lam / |z|), rsqrt on the EUP.
    # NOTE: mag2 can over/underflow in f32 for |latent| >~ 1e19 / <~ 1e-23;
    # benign for realistic inputs (matches the torch reference inside that range).
    half = latent.shape[1] // 2
    re = latent[:, :half]
    im = latent[:, half:]
    mag2 = re * re + im * im
    scale = jnp.maximum(1.0 - lam * lax.rsqrt(mag2), 0.0)
    scale = jnp.where(mag2 > 0.0, scale, 0.0)   # |z| == 0 -> 0 (torch nan_to_num)
    sp_re = re * scale
    sp_im = im * scale

    # latent_sparse output: two lane-aligned half writes (no concatenate op).
    sparse_ref[:, :half] = sp_re.astype(sparse_ref.dtype)
    sparse_ref[:, half:] = sp_im.astype(sparse_ref.dtype)

    # bf16 staging scratch so the decoder runs ONE full-K (K=D) matmul instead
    # of two half-K pushes (K=D/2 under-fills the 256-deep MXU on v6e/v7x).
    sp_bf16_ref[:, :half] = sp_re.astype(jnp.bfloat16)
    sp_bf16_ref[:, half:] = sp_im.astype(jnp.bfloat16)
    rec = (jnp.dot(sp_bf16_ref[...], wd_ref[...],
                   preferred_element_type=jnp.float32)
           + bd_ref[...])
    rec_ref[...] = rec.astype(rec_ref.dtype)


# --------------------------- parameter prep --------------------------------

def prepare_params(w_enc, b_enc, w_dec, b_dec):
    """One-time parameter prep (hoisted out of the per-call path):
    pre-transpose to [in, out] so the kernel computes x @ W.T, and cast the
    weights to bf16 (the kernel keeps f32 accumulation)."""
    D = w_enc.shape[0]
    return (jnp.asarray(w_enc).T.astype(jnp.bfloat16),
            jnp.asarray(b_enc).reshape(1, D).astype(jnp.float32),
            jnp.asarray(w_dec).T.astype(jnp.bfloat16),
            jnp.asarray(b_dec).reshape(1, D).astype(jnp.float32))


# --------------------------- hardware queries -------------------------------

def _device_kind():
    try:
        return jax.devices()[0].device_kind.lower()
    except Exception:
        return ""


def _vmem_capacity_bytes():
    try:
        return int(pltpu.get_tpu_info().vmem_capacity_bytes)
    except Exception:
        # v7x has 64 MiB per TensorCore; v5e/v6e have 128 MiB.
        return (64 << 20) if "v7" in _device_kind() else (128 << 20)


def _vmem_ceiling_bytes():
    ceiling = min(_vmem_capacity_bytes() - (8 << 20), 100 << 20)
    if "v7" in _device_kind():
        ceiling = min(ceiling, 56 << 20)   # 64 MiB per TC on v7x, leave headroom
    return ceiling


def _default_preferred_tm():
    kind = _device_kind()
    # v5e is the most HBM-bound generation: fewer, larger grid steps.
    if "v5 lite" in kind or "v5e" in kind:
        return 512
    return 256   # matches the 2x256x256 MXU on v6e/v7x


# ----------------------------- tiling helpers --------------------------------

def _round_up(x, m):
    return ((x + m - 1) // m) * m


def _choose_batch_tile(batch, preferred):
    """Multiple-of-8 batch tile <= preferred.  Aims for >= 2 grid steps so the
    'parallel' grid axis can actually shard across both TensorCores on v7x."""
    tm = min(preferred, _round_up(batch, 8))
    if batch > 8 and _round_up(batch, 8) // tm < 2:
        tm = max(8, _round_up(pl.cdiv(batch, 2), 8))
    return tm


def _spec(shape, index_map, buffers=None):
    """BlockSpec with an optional pipeline-depth hint (gracefully dropped if
    this Pallas build does not accept pipeline_mode)."""
    if buffers is not None:
        try:
            return pl.BlockSpec(shape, index_map,
                                pipeline_mode=pl.Buffered(buffers))
        except (TypeError, AttributeError):
            pass
    return pl.BlockSpec(shape, index_map)


# ------------------------------ forward ------------------------------------

@functools.partial(
    jax.jit, static_argnames=("preferred_tm", "out_dtype", "use_buffer_hints"))
def _forward_impl(x, w_enc_t, b_enc, w_dec_t, b_dec, lamb,
                  preferred_tm, out_dtype, use_buffer_hints):
    B, D = x.shape
    assert D % 2 == 0, "complex soft-threshold needs an even feature dimension"
    # NOTE: D // 2 should be a multiple of 128 to keep the halves lane-aligned.

    out_dtype = x.dtype if out_dtype is None else jnp.dtype(out_dtype)
    out_sz = jnp.dtype(out_dtype).itemsize

    tm = _choose_batch_tile(B, preferred_tm)
    b_pad = _round_up(B, tm)
    if b_pad != B:
        # cdiv-style grid: pad the batch instead of a whole-batch fallback tile.
        x = jnp.pad(x, ((0, b_pad - B), (0, 0)))
    grid = (b_pad // tm,)

    # ---- VMEM budget (per TensorCore on v7x; each TC holds its own weights) --
    w_buf = 1 if use_buffer_hints else 2
    weight_bytes = w_buf * 2 * D * D * 2          # two bf16 DxD weights
    bias_bytes = w_buf * 2 * D * 4                # two f32 (1, D) biases
    x_bytes = (3 if use_buffer_hints else 2) * tm * D * 4
    out_bytes = 2 * 2 * tm * D * out_sz           # two double-buffered outputs
    scratch_bytes = tm * D * 2                    # bf16 staging scratch
    need = weight_bytes + bias_bytes + x_bytes + out_bytes + scratch_bytes

    vmem_limit = min(max(int(1.25 * need), 32 << 20), _vmem_ceiling_bytes())
    vmem_limit = int(max(vmem_limit, need + (2 << 20)))  # never under-provision
    # TODO(synk): for very large D (resident bf16 weights alone exceed the
    # per-TC VMEM, ~D > 3.5k on v7x) add a second grid axis tiling the weight
    # output dim (blocks (D, tn)) instead of keeping weights fully resident.

    cost = pl.CostEstimate(
        flops=2 * 2 * b_pad * D * D,                       # two [B,D]x[D,D] matmuls
        transcendentals=b_pad * (D // 2),                  # one rsqrt per complex elem
        bytes_accessed=2 * D * D * 2 + 2 * D * 4 + b_pad * D * 4
                       + 2 * b_pad * D * out_sz,
    )

    w_bufs = 1 if use_buffer_hints else None   # resident operands: single buffer
    x_bufs = 3 if use_buffer_hints else None   # deeper pipeline on the streamed input

    grid_spec = pltpu.PrefetchScalarGridSpec(
        num_scalar_prefetch=1,                                # lamb -> SMEM
        grid=grid,
        in_specs=[
            _spec((tm, D), lambda i, lam: (i, 0), x_bufs),    # x tile (pipelined)
            _spec((D, D), lambda i, lam: (0, 0), w_bufs),     # encoder weight (resident)
            _spec((1, D), lambda i, lam: (0, 0), w_bufs),     # encoder bias   (resident)
            _spec((D, D), lambda i, lam: (0, 0), w_bufs),     # decoder weight (resident)
            _spec((1, D), lambda i, lam: (0, 0), w_bufs),     # decoder bias   (resident)
        ],
        out_specs=(
            pl.BlockSpec((tm, D), lambda i, lam: (i, 0)),     # reconstructed tile
            pl.BlockSpec((tm, D), lambda i, lam: (i, 0)),     # latent_sparse tile
        ),
        scratch_shapes=[pltpu.VMEM((tm, D), jnp.bfloat16)],   # bf16 decoder staging
    )

    rec, sparse = pl.pallas_call(
        _sparse_ae_kernel,
        out_shape=(jax.ShapeDtypeStruct((b_pad, D), out_dtype),
                   jax.ShapeDtypeStruct((b_pad, D), out_dtype)),
        grid_spec=grid_spec,
        compiler_params=pltpu.CompilerParams(
            dimension_semantics=("parallel",),                # megacore shard on v7x
            vmem_limit_bytes=vmem_limit),
        cost_estimate=cost,
    )(jnp.asarray(lamb, jnp.float32).reshape(1),
      x, w_enc_t, b_enc, w_dec_t, b_dec)

    if b_pad != B:
        rec = rec[:B]
        sparse = sparse[:B]
    return rec, sparse


def sparse_autoencoder_forward(x, w_enc_t, b_enc, w_dec_t, b_dec, lamb,
                               preferred_tm=None, out_dtype=None):
    """x: [B, D] f32; w_*_t: [D, D] pre-transposed bf16; b_*: [1, D] f32;
    lamb: scalar.  Returns (reconstructed, latent_sparse), both [B, D].
    out_dtype=None keeps the module's f32 outputs; pass jnp.bfloat16 to halve
    the (dominant) output writeback traffic if downstream allows it."""
    if preferred_tm is None:
        preferred_tm = _default_preferred_tm()
    args = (x, w_enc_t, b_enc, w_dec_t, b_dec, lamb)
    try:
        return _forward_impl(*args, preferred_tm=int(preferred_tm),
                             out_dtype=out_dtype, use_buffer_hints=True)
    except Exception:
        # Robust fallback: the pl.Buffered pipeline hints are perf-only; retry
        # without them if this Pallas/Mosaic build rejects them.
        return _forward_impl(*args, preferred_tm=int(preferred_tm),
                             out_dtype=out_dtype, use_buffer_hints=False)


# ------------------------------ references ---------------------------------

def _ref_forward_f32(x, w_enc, b_enc, w_dec, b_dec, lamb):
    """Pure-JAX f32 reference mirroring the PyTorch module."""
    latent = x @ w_enc.T + b_enc
    lam = jnp.abs(lamb)
    half = latent.shape[1] // 2
    re, im = latent[:, :half], latent[:, half:]
    mag = jnp.sqrt(re * re + im * im)
    scale = jnp.where(mag > 0,
                      jnp.maximum(mag - lam, 0.0) / jnp.where(mag > 0, mag, 1.0),
                      0.0)
    sparse = jnp.concatenate([re * scale, im * scale], axis=1)
    rec = sparse @ w_dec.T + b_dec
    return rec, sparse


def _ref_forward_bf16(x, w_enc_t, b_enc, w_dec_t, b_dec, lamb):
    """Reference that mirrors the kernel's dtype path (bf16 operands, f32 acc,
    single full-K decoder matmul)."""
    latent = jnp.dot(x.astype(jnp.bfloat16), w_enc_t,
                     preferred_element_type=jnp.float32) + b_enc
    half = latent.shape[1] // 2
    re, im = latent[:, :half], latent[:, half:]
    mag2 = re * re + im * im
    scale = jnp.where(mag2 > 0,
                      jnp.maximum(1.0 - jnp.abs(lamb) * lax.rsqrt(mag2), 0.0),
                      0.0)
    sparse = jnp.concatenate([re * scale, im * scale], axis=1)
    rec = jnp.dot(sparse.astype(jnp.bfloat16), w_dec_t,
                  preferred_element_type=jnp.float32) + b_dec
    return rec, sparse


# --------------------------------- demo ------------------------------------

if __name__ == "__main__":
    # Small shapes: D=256 so the complex split D/2=128 is lane-aligned; B=256
    # exercises a >=2-step batch grid with resident, single-buffered weights.
    B, D = 256, 256
    key = jax.random.PRNGKey(0)
    k_x, k_we, k_be, k_wd, k_bd = jax.random.split(key, 5)

    bound = 1.0 / jnp.sqrt(jnp.float32(D))   # PyTorch Linear default init range
    x = jax.random.normal(k_x, (B, D), dtype=jnp.float32)
    w_enc = jax.random.uniform(k_we, (D, D), jnp.float32, -bound, bound)
    b_enc = jax.random.uniform(k_be, (D,), jnp.float32, -bound, bound)
    w_dec = jax.random.uniform(k_wd, (D, D), jnp.float32, -bound, bound)
    b_dec = jax.random.uniform(k_bd, (D,), jnp.float32, -bound, bound)
    lamb = jnp.float32(0.01)                 # nn.Parameter init value in the module

    params = prepare_params(w_enc, b_enc, w_dec, b_dec)   # one-time transpose + bf16

    rec, sparse = sparse_autoencoder_forward(x, *params, lamb)
    jax.block_until_ready((rec, sparse))
    assert rec.shape == (B, D) and sparse.shape == (B, D)

    # Tight check against a JAX reference following the kernel's dtype path.
    rec_bf, sparse_bf = _ref_forward_bf16(x, *params, lamb)
    assert jnp.allclose(sparse, sparse_bf, rtol=1e-3, atol=1e-3)
    assert jnp.allclose(rec, rec_bf, rtol=1e-3, atol=1e-3)

    # Looser check against the full-f32 PyTorch-equivalent math (tolerance
    # loosened for the bf16 weight cast; f32 accumulation is kept in-kernel).
    rec_f32, sparse_f32 = _ref_forward_f32(x, w_enc, b_enc, w_dec, b_dec, lamb)
    assert jnp.allclose(sparse, sparse_f32, rtol=2e-2, atol=2e-2)
    assert jnp.allclose(rec, rec_f32, rtol=2e-2, atol=2e-2)

    # Ragged batch: exercises the cdiv/pad path (no whole-batch fallback tile).
    Br = 56
    rec_r, sparse_r = sparse_autoencoder_forward(x[:Br], *params, lamb)
    jax.block_until_ready((rec_r, sparse_r))
    assert rec_r.shape == (Br, D) and sparse_r.shape == (Br, D)
    assert jnp.allclose(sparse_r, sparse_bf[:Br], rtol=1e-3, atol=1e-3)
    assert jnp.allclose(rec_r, rec_bf[:Br], rtol=1e-3, atol=1e-3)

    print("KERNEL_OK")
</pallas_src>

<mosaic_0001>
module attributes {stable_mosaic.version = 11 : i64} {
  func.func @_sparse_ae_kernel(%arg0: i32, %arg1: memref<1xf32, #tpu.memory_space<smem>>, %arg2: memref<128x256xf32, #tpu.memory_space<vmem>>, %arg3: memref<256x256xbf16, #tpu.memory_space<vmem>>, %arg4: memref<1x256xf32, #tpu.memory_space<vmem>>, %arg5: memref<256x256xbf16, #tpu.memory_space<vmem>>, %arg6: memref<1x256xf32, #tpu.memory_space<vmem>>, %arg7: memref<128x256xf32, #tpu.memory_space<vmem>>, %arg8: memref<128x256xf32, #tpu.memory_space<vmem>>, %arg9: memref<128x256xbf16, #tpu.memory_space<vmem>>) attributes {dimension_semantics = [#tpu.dimension_semantics<parallel>], iteration_bounds = array<i64: 2>, scalar_prefetch = 1 : i64, scratch_operands = 1 : i64, tpu.core_type = #tpu.core_type<tc>, window_params = [{transform_indices = @transform_0, window_bounds = array<i64: 128, 256>}, {pipeline_mode = #tpu.pipeline_mode<synchronous>, transform_indices = @transform_1, window_bounds = array<i64: 256, 256>}, {pipeline_mode = #tpu.pipeline_mode<synchronous>, transform_indices = @transform_2, window_bounds = array<i64: 1, 256>}, {pipeline_mode = #tpu.pipeline_mode<synchronous>, transform_indices = @transform_3, window_bounds = array<i64: 256, 256>}, {pipeline_mode = #tpu.pipeline_mode<synchronous>, transform_indices = @transform_4, window_bounds = array<i64: 1, 256>}, {transform_indices = @transform_5, window_bounds = array<i64: 128, 256>}, {transform_indices = @transform_6, window_bounds = array<i64: 128, 256>}]} {
    %c0 = arith.constant 0 : index
    %0 = memref.load %arg1[%c0] : memref<1xf32, #tpu.memory_space<smem>>
    %1 = math.absf %0 : f32
    %c0_0 = arith.constant 0 : index
    %c0_1 = arith.constant 0 : index
    %2 = vector.load %arg2[%c0_0, %c0_1] : memref<128x256xf32, #tpu.memory_space<vmem>>, vector<128x256xf32>
    %3 = arith.truncf %2 : vector<128x256xf32> to vector<128x256xbf16>
    %c0_2 = arith.constant 0 : index
    %c0_3 = arith.constant 0 : index
    %4 = vector.load %arg3[%c0_2, %c0_3] : memref<256x256xbf16, #tpu.memory_space<vmem>>, vector<256x256xbf16>
    %cst = arith.constant dense<0.000000e+00> : vector<128x256xf32>
    %5 = tpu.matmul %3, %4, %cst {dimension_numbers = #tpu.dot_dimension_numbers<[1], [0], [0], [1], [0, 0, 1, 1], [], []>} : vector<128x256xbf16>, vector<256x256xbf16>, vector<128x256xf32> -> vector<128x256xf32>
    %c0_4 = arith.constant 0 : index
    %c0_5 = arith.constant 0 : index
    %6 = vector.load %arg4[%c0_4, %c0_5] : memref<1x256xf32, #tpu.memory_space<vmem>>, vector<1x256xf32>
    %7 = vector.broadcast %6 : vector<1x256xf32> to vector<128x256xf32>
    %8 = arith.addf %5, %7 : vector<128x256xf32>
    %9 = vector.extract_strided_slice %8 {offsets = [0, 0], sizes = [128, 128], strides = [1, 1]} : vector<128x256xf32> to vector<128x128xf32>
    %10 = vector.extract_strided_slice %8 {offsets = [0, 128], sizes = [128, 128], strides = [1, 1]} : vector<128x256xf32> to vector<128x128xf32>
    %11 = arith.mulf %9, %9 : vector<128x128xf32>
    %12 = arith.mulf %10, %10 : vector<128x128xf32>
    %13 = arith.addf %11, %12 : vector<128x128xf32>
    %14 = math.rsqrt %13 : vector<128x128xf32>
    %15 = vector.broadcast %1 : f32 to vector<128x128xf32>
    %16 = arith.mulf %15, %14 : vector<128x128xf32>
    %cst_6 = arith.constant 1.000000e+00 : f32
    %17 = vector.broadcast %cst_6 : f32 to vector<128x128xf32>
    %18 = arith.subf %17, %16 : vector<128x128xf32>
    %cst_7 = arith.constant 0.000000e+00 : f32
    %19 = vector.broadcast %cst_7 : f32 to vector<128x128xf32>
    %20 = arith.maximumf %18, %19 : vector<128x128xf32>
    %cst_8 = arith.constant 0.000000e+00 : f32
    %21 = vector.broadcast %cst_8 : f32 to vector<128x128xf32>
    %22 = arith.cmpf ogt, %13, %21 : vector<128x128xf32>
    %cst_9 = arith.constant 0.000000e+00 : f32
    %23 = vector.broadcast %cst_9 : f32 to vector<128x128xf32>
    %24 = arith.select %22, %20, %23 : vector<128x128xi1>, vector<128x128xf32>
    %25 = arith.mulf %9, %24 : vector<128x128xf32>
    %26 = arith.mulf %10, %24 : vector<128x128xf32>
    %c0_10 = arith.constant 0 : index
    %c0_11 = arith.constant 0 : index
    %27 = vector.load %arg8[%c0_10, %c0_11] : memref<128x256xf32, #tpu.memory_space<vmem>>, vector<128x128xf32>
    tpu.vector_store %arg8[%c0_10, %c0_11], %25 {strides = array<i32>} : memref<128x256xf32, #tpu.memory_space<vmem>>, vector<128x128xf32>,
    %c0_12 = arith.constant 0 : index
    %c128 = arith.constant 128 : index
    %28 = vector.load %arg8[%c0_12, %c128] : memref<128x256xf32, #tpu.memory_space<vmem>>, vector<128x128xf32>
    tpu.vector_store %arg8[%c0_12, %c128], %26 {strides = array<i32>} : memref<128x256xf32, #tpu.memory_space<vmem>>, vector<128x128xf32>,
    %29 = arith.truncf %25 : vector<128x128xf32> to vector<128x128xbf16>
    %c0_13 = arith.constant 0 : index
    %c0_14 = arith.constant 0 : index
    %30 = vector.load %arg9[%c0_13, %c0_14] : memref<128x256xbf16, #tpu.memory_space<vmem>>, vector<128x128xbf16>
    tpu.vector_store %arg9[%c0_13, %c0_14], %29 {strides = array<i32>} : memref<128x256xbf16, #tpu.memory_space<vmem>>, vector<128x128xbf16>,
    %31 = arith.truncf %26 : vector<128x128xf32> to vector<128x128xbf16>
    %c0_15 = arith.constant 0 : index
    %c128_16 = arith.constant 128 : index
    %32 = vector.load %arg9[%c0_15, %c128_16] : memref<128x256xbf16, #tpu.memory_space<vmem>>, vector<128x128xbf16>
    tpu.vector_store %arg9[%c0_15, %c128_16], %31 {strides = array<i32>} : memref<128x256xbf16, #tpu.memory_space<vmem>>, vector<128x128xbf16>,
    %c0_17 = arith.constant 0 : index
    %c0_18 = arith.constant 0 : index
    %33 = vector.load %arg9[%c0_17, %c0_18] : memref<128x256xbf16, #tpu.memory_space<vmem>>, vector<128x256xbf16>
    %c0_19 = arith.constant 0 : index
    %c0_20 = arith.constant 0 : index
    %34 = vector.load %arg5[%c0_19, %c0_20] : memref<256x256xbf16, #tpu.memory_space<vmem>>, vector<256x256xbf16>
    %cst_21 = arith.constant dense<0.000000e+00> : vector<128x256xf32>
    %35 = tpu.matmul %33, %34, %cst_21 {dimension_numbers = #tpu.dot_dimension_numbers<[1], [0], [0], [1], [0, 0, 1, 1], [], []>} : vector<128x256xbf16>, vector<256x256xbf16>, vector<128x256xf32> -> vector<128x256xf32>
    %c0_22 = arith.constant 0 : index
    %c0_23 = arith.constant 0 : index
    %36 = vector.load %arg6[%c0_22, %c0_23] : memref<1x256xf32, #tpu.memory_space<vmem>>, vector<1x256xf32>
    %37 = vector.broadcast %36 : vector<1x256xf32> to vector<128x256xf32>
    %38 = arith.addf %35, %37 : vector<128x256xf32>
    %c0_24 = arith.constant 0 : index
    %c0_25 = arith.constant 0 : index
    %39 = vector.load %arg7[%c0_24, %c0_25] : memref<128x256xf32, #tpu.memory_space<vmem>>, vector<128x256xf32>
    tpu.vector_store %arg7[%c0_24, %c0_25], %38 {strides = array<i32>} : memref<128x256xf32, #tpu.memory_space<vmem>>, vector<128x256xf32>,
    return
  }
  func.func @transform_0(%arg0: i32, %arg1: memref<1xf32, #tpu.memory_space<smem>>) -> (i32, i32) {
    %c0_i32 = arith.constant 0 : i32
    %c0_i32_0 = arith.constant 0 : i32
    return %arg0, %c0_i32 : i32, i32
  }
  func.func @transform_1(%arg0: i32, %arg1: memref<1xf32, #tpu.memory_space<smem>>) -> (i32, i32) {
    %c0_i32 = arith.constant 0 : i32
    %c0_i32_0 = arith.constant 0 : i32
    %c0_i32_1 = arith.constant 0 : i32
    return %c0_i32, %c0_i32_0 : i32, i32
  }
  func.func @transform_2(%arg0: i32, %arg1: memref<1xf32, #tpu.memory_space<smem>>) -> (i32, i32) {
    %c0_i32 = arith.constant 0 : i32
    %c0_i32_0 = arith.constant 0 : i32
    %c0_i32_1 = arith.constant 0 : i32
    return %c0_i32, %c0_i32_0 : i32, i32
  }
  func.func @transform_3(%arg0: i32, %arg1: memref<1xf32, #tpu.memory_space<smem>>) -> (i32, i32) {
    %c0_i32 = arith.constant 0 : i32
    %c0_i32_0 = arith.constant 0 : i32
    %c0_i32_1 = arith.constant 0 : i32
    return %c0_i32, %c0_i32_0 : i32, i32
  }
  func.func @transform_4(%arg0: i32, %arg1: memref<1xf32, #tpu.memory_space<smem>>) -> (i32, i32) {
    %c0_i32 = arith.constant 0 : i32
    %c0_i32_0 = arith.constant 0 : i32
    %c0_i32_1 = arith.constant 0 : i32
    return %c0_i32, %c0_i32_0 : i32, i32
  }
  func.func @transform_5(%arg0: i32, %arg1: memref<1xf32, #tpu.memory_space<smem>>) -> (i32, i32) {
    %c0_i32 = arith.constant 0 : i32
    %c0_i32_0 = arith.constant 0 : i32
    return %arg0, %c0_i32 : i32, i32
  }
  func.func @transform_6(%arg0: i32, %arg1: memref<1xf32, #tpu.memory_space<smem>>) -> (i32, i32) {
    %c0_i32 = arith.constant 0 : i32
    %c0_i32_0 = arith.constant 0 : i32
    return %arg0, %c0_i32 : i32, i32
  }
}

</mosaic_0001>

<llo_original>
// kernel: _forward_impl.1
$region0: #{_forward_impl.1}
  #allocation0 [shape = 'u32[]', space=smem, size = 0x4, offset = 0x4, fixed_abs, tag = 'smem constant byte address 0x4 - core index']
  #allocation1 [shape = 'u32[144,128]{1,0:T(1,128)}', space=vmem, size = 0x12000, scoped, tag = 'internal scratch']
  #allocation2 [shape = 'bf16[128,256]{1,0:T(16,128)(2,1)}', space=vmem, size = 0x10000, scoped, tag = 'scratch operand']
  #allocation3 [shape = 's32[1]{0}', space=sflag, size = 0x4, scoped, tag = 'scoped memory for _forward_impl.1']
  #allocation4 [shape = 'f32[1]{0:T(128)S(6)}', space=smem, size = 0x200, scoped, tag = 'prefetched SMEM operand 0']
  %s0 = inlined_call_operand.<no memory space> [shape: f32[1], index: 0, kind: input, shape index: {}]
  %s1 = inlined_call_operand.hbm [shape: f32[256,256], index: 1, kind: input, shape index: {}]
  %s2 = inlined_call_operand.hbm [shape: bf16[256,256], index: 2, kind: input, shape index: {}]
  %s3 = inlined_call_operand.vmem [shape: f32[1,256], index: 3, kind: input, shape index: {}]
  %s4 = inlined_call_operand.hbm [shape: bf16[256,256], index: 4, kind: input, shape index: {}]
  %s5 = inlined_call_operand.vmem [shape: f32[1,256], index: 5, kind: input, shape index: {}]
  %s6 = inlined_call_operand.hbm [shape: f32[256,256], index: 6, kind: output, shape index: {0}]
  %s7 = inlined_call_operand.hbm [shape: f32[256,256], index: 7, kind: output, shape index: {1}]
  %8 = xla_tuple %s6, %s7
  %s9 = sld [smem:[#allocation0]]
  $region73: #{_forward_impl.1} parent=0
    _
  %s11 = ssub.s32 1, %s9
  %s12 = scalar_select 0, %s11, %s9
  %13 = sst [smem:[#allocation4]] %s0
  $region1: #{_forward_impl.1} parent=0
    #allocation5 [shape = 'u8[262144]{0}', space=vmem, size = 0x40000, scoped, tag = 'input window, operand 1']
    #allocation6 [shape = 's32[2]{0}', space=sflag, size = 0x8, scoped, tag = 'scoped memory for _forward_impl.1']
    #allocation7 [shape = 's32[2]{0}', space=sflag, size = 0x8, scoped, tag = 'scoped memory for _forward_impl.1']
    #allocation8 [shape = 'u8[131072]{0}', space=vmem, size = 0x20000, scoped, tag = 'input window, operand 2, single buffered']
    #allocation9 [shape = 's32[1]{0}', space=sflag, size = 0x4, scoped, tag = 'scoped memory for _forward_impl.1']
    #allocation10 [shape = 'u8[131072]{0}', space=vmem, size = 0x20000, scoped, tag = 'input window, operand 4, single buffered']
    #allocation11 [shape = 'u8[262144]{0}', space=vmem, size = 0x40000, scoped, tag = 'output window, operand 0']
    #allocation12 [shape = 'u8[262144]{0}', space=vmem, size = 0x40000, scoped, tag = 'output window, operand 1']
    #allocation13 [shape = 's32[2]{0}', space=sflag, size = 0x8, scoped, tag = 'scoped memory for _forward_impl.1']
    %14 = vsyncpa [#allocation6], 0
    %s15 = scalar_lea.sflag [#allocation6], 1
    %16 = vsyncpa %s15, 0
    %17 = vsyncpa [#allocation9], 0
    %18 = vsyncpa [#allocation7], 0
    %s19 = scalar_lea.sflag [#allocation7], 1
    %20 = vsyncpa %s19, 0
    %21 = vsyncpa [#allocation13], 0
    %s22 = scalar_lea.sflag [#allocation13], 1
    %23 = vsyncpa %s22, 0
    loop: start=0, step=1, limit=4
    $region2: #{_forward_impl.1} parent=1 // loop_pre_header
      _
    $region3: #{_forward_impl.1} parent=1 // loop_header
      %s25 = sphi 0, %s29
      %p26 = scmp.ge.s32.totalorder %s25, 4
      %s35 = sphi 0, %s37
      %s38 = sphi 0, %s35
      %s39 = sphi 0, %s38
      %s55 = sphi 0, %s39
      %s59 = sphi 0, %s59
      %s61 = sphi 0, %s59
      %s62 = sphi 0, %s61
      %s76 = sphi 0, %s62
      %s80 = sphi 0, %s80
      %s82 = sphi 0, %s80
      %s83 = sphi 0, %s82
      %s97 = sphi 0, %s83
      %s101 = sphi 0, %s101
      %s103 = sphi 0, %s101
      %s104 = sphi 0, %s103
      %s118 = sphi 0, %s104
      %s122 = sphi 0, %s122
      %s124 = sphi 0, %s122
      %s125 = sphi 0, %s124
      %s139 = sphi 0, %s125
      %s145 = sphi 0, %s147
      %s148 = sphi 0, %s145
      %s149 = sphi 0, %s148
      %s165 = sphi 0, %s149
      %s171 = sphi 0, %s173
      %s174 = sphi 0, %s171
      %s175 = sphi 0, %s174
      %s191 = sphi 0, %s175
    $region4: #{_forward_impl.1} parent=1 // loop_header_branch
      %28 = sbr.rel (%p26) target = $region8
    $region5: #{_forward_impl.1} parent=1 // loop_body
      %s30 = ssub.s32 %s25, 1
      %s31 = ssub.s32 %s25, 2
      %s32 = sadd.s32 %s25, 1
      %s33 = ssub.s32 %s25, %s32
      %p34 = scmp.eq.s32.totalorder %s33, 0
      %s36 = sadd.s32 %s35, 1
      %s37 = scalar_select %p34, %s35, %s36
      %p40 = pneg %p34
      %p41 = scmp.eq.s32.totalorder %s25, 1
      %p42 = por %p40, %p41
      %p43 = scmp.ne.s32.totalorder %s35, %s38
      %p44 = scmp.eq.s32.totalorder %s25, 0
      %p45 = por %p43, %p44
      %p46 = scmp.ne.s32.totalorder %s35, %s38
      %p47 = scmp.eq.s32.totalorder %s30, 1
      %p48 = por %p46, %p47
      %p49 = scmp.ne.s32.totalorder %s38, %s39
      %p50 = scmp.eq.s32.totalorder %s30, 0
      %p51 = por %p49, %p50
      %p52 = scmp.ne.s32.totalorder %s38, %s39
      %p53 = scmp.eq.s32.totalorder %s31, 1
      %p54 = por %p52, %p53
      %p56 = scmp.ne.s32.totalorder %s39, %s55
      %p57 = scmp.eq.s32.totalorder %s31, 0
      %p58 = por %p56, %p57
      %s60 = sadd.s32 %s59, 1
      %p63 = scmp.eq.s32.totalorder %s25, 1
      %p64 = scmp.ne.s32.totalorder %s59, %s61
      %p65 = scmp.eq.s32.totalorder %s25, 0
      %p66 = por %p64, %p65
      %p67 = scmp.ne.s32.totalorder %s59, %s61
      %p68 = scmp.eq.s32.totalorder %s30, 1
      %p69 = por %p67, %p68
      %p70 = scmp.ne.s32.totalorder %s61, %s62
      %p71 = scmp.eq.s32.totalorder %s30, 0
      %p72 = por %p70, %p71
      %p73 = scmp.ne.s32.totalorder %s61, %s62
      %p74 = scmp.eq.s32.totalorder %s31, 1
      %p75 = por %p73, %p74
      %p77 = scmp.ne.s32.totalorder %s62, %s76
      %p78 = scmp.eq.s32.totalorder %s31, 0
      %p79 = por %p77, %p78
      %s81 = sadd.s32 %s80, 1
      %p84 = scmp.eq.s32.totalorder %s25, 1
      %p85 = scmp.ne.s32.totalorder %s80, %s82
      %p86 = scmp.eq.s32.totalorder %s25, 0
      %p87 = por %p85, %p86
      %p88 = scmp.ne.s32.totalorder %s80, %s82
      %p89 = scmp.eq.s32.totalorder %s30, 1
      %p90 = por %p88, %p89
      %p91 = scmp.ne.s32.totalorder %s82, %s83
      %p92 = scmp.eq.s32.totalorder %s30, 0
      %p93 = por %p91, %p92
      %p94 = scmp.ne.s32.totalorder %s82, %s83
      %p95 = scmp.eq.s32.totalorder %s31, 1
      %p96 = por %p94, %p95
      %p98 = scmp.ne.s32.totalorder %s83, %s97
      %p99 = scmp.eq.s32.totalorder %s31, 0
      %p100 = por %p98, %p99
      %s102 = sadd.s32 %s101, 1
      %p105 = scmp.eq.s32.totalorder %s25, 1
      %p106 = scmp.ne.s32.totalorder %s101, %s103
      %p107 = scmp.eq.s32.totalorder %s25, 0
      %p108 = por %p106, %p107
      %p109 = scmp.ne.s32.totalorder %s101, %s103
      %p110 = scmp.eq.s32.totalorder %s30, 1
      %p111 = por %p109, %p110
      %p112 = scmp.ne.s32.totalorder %s103, %s104
      %p113 = scmp.eq.s32.totalorder %s30, 0
      %p114 = por %p112, %p113
      %p115 = scmp.ne.s32.totalorder %s103, %s104
      %p116 = scmp.eq.s32.totalorder %s31, 1
      %p117 = por %p115, %p116
      %p119 = scmp.ne.s32.totalorder %s104, %s118
      %p120 = scmp.eq.s32.totalorder %s31, 0
      %p121 = por %p119, %p120
      %s123 = sadd.s32 %s122, 1
      %p126 = scmp.eq.s32.totalorder %s25, 1
      %p127 = scmp.ne.s32.totalorder %s122, %s124
      %p128 = scmp.eq.s32.totalorder %s25, 0
      %p129 = por %p127, %p128
      %p130 = scmp.ne.s32.totalorder %s122, %s124
      %p131 = scmp.eq.s32.totalorder %s30, 1
      %p132 = por %p130, %p131
      %p133 = scmp.ne.s32.totalorder %s124, %s125
      %p134 = scmp.eq.s32.totalorder %s30, 0
      %p135 = por %p133, %p134
      %p136 = scmp.ne.s32.totalorder %s124, %s125
      %p137 = scmp.eq.s32.totalorder %s31, 1
      %p138 = por %p136, %p137
      %p140 = scmp.ne.s32.totalorder %s125, %s139
      %p141 = scmp.eq.s32.totalorder %s31, 0
      %p142 = por %p140, %p141
      %s143 = ssub.s32 %s25, %s32
      %p144 = scmp.eq.s32.totalorder %s143, 0
      %s146 = sadd.s32 %s145, 1
      %s147 = scalar_select %p144, %s145, %s146
      %p150 = pneg %p144
      %p151 = scmp.eq.s32.totalorder %s25, 1
      %p152 = por %p150, %p151
      %p153 = scmp.ne.s32.totalorder %s145, %s148
      %p154 = scmp.eq.s32.totalorder %s25, 0
      %p155 = por %p153, %p154
      %p156 = scmp.ne.s32.totalorder %s145, %s148
      %p157 = scmp.eq.s32.totalorder %s30, 1
      %p158 = por %p156, %p157
      %p159 = scmp.ne.s32.totalorder %s148, %s149
      %p160 = scmp.eq.s32.totalorder %s30, 0
      %p161 = por %p159, %p160
      %p162 = scmp.ne.s32.totalorder %s148, %s149
      %p163 = scmp.eq.s32.totalorder %s31, 1
      %p164 = por %p162, %p163
      %p166 = scmp.ne.s32.totalorder %s149, %s165
      %p167 = scmp.eq.s32.totalorder %s31, 0
      %p168 = por %p166, %p167
      %s169 = ssub.s32 %s25, %s32
      %p170 = scmp.eq.s32.totalorder %s169, 0
      %s172 = sadd.s32 %s171, 1
      %s173 = scalar_select %p170, %s171, %s172
      %p176 = pneg %p170
      %p177 = scmp.eq.s32.totalorder %s25, 1
      %p178 = por %p176, %p177
      %p179 = scmp.ne.s32.totalorder %s171, %s174
      %p180 = scmp.eq.s32.totalorder %s25, 0
      %p181 = por %p179, %p180
      %p182 = scmp.ne.s32.totalorder %s171, %s174
      %p183 = scmp.eq.s32.totalorder %s30, 1
      %p184 = por %p182, %p183
      %p185 = scmp.ne.s32.totalorder %s174, %s175
      %p186 = scmp.eq.s32.totalorder %s30, 0
      %p187 = por %p185, %p186
      %p188 = scmp.ne.s32.totalorder %s174, %s175
      %p189 = scmp.eq.s32.totalorder %s31, 1
      %p190 = por %p188, %p189
      %p192 = scmp.ne.s32.totalorder %s175, %s191
      %p193 = scmp.eq.s32.totalorder %s31, 0
      %p194 = por %p192, %p193
      %p195 = scmp.le.s32.totalorder 1, %s25
      %p196 = scmp.lt.s32.totalorder %s25, 3
      %p197 = pnand %p195, %p196
      %p198 = pneg %p197
      // Predicated region
      $region9: #{_forward_impl.1} parent=5 // pred_check
        _
      $region10: #{_forward_impl.1} parent=5 // pred_check_branch
        %200 = sbr.rel (%p197) target = $region12
      $region11: #{_forward_impl.1} parent=5 // pred_region
        %s201 = ssub.s32 %s25, 1
        // Predicated region
        $region13: #{_forward_impl.1} parent=11 // pred_check
          %p202 = pneg %p72
        $region14: #{_forward_impl.1} parent=11 // pred_check_branch
          %204 = sbr.rel (%p202) target = $region16
        $region15: #{_forward_impl.1} parent=11 // pred_region
          %s206 = ssub.s32 4096, 4096
          %207 = vsyncadd [#allocation9], %s206
          %s208 = sshll.u32 [#allocation8], 4
          %s209 = int_to_ptr.vmem [resolvable:$true] %s208
          %214 = dma.hbm_to_vmem [thread:$0]  %s2, 4096, %s209, [#allocation9], 128, 128, 8
        $region16: #{_forward_impl.1} parent=11 // pred_fallthru
          _
        // Predicated region
        $region17: #{_forward_impl.1} parent=11 // pred_check
          %p215 = pneg %p93
        $region18: #{_forward_impl.1} parent=11 // pred_check_branch
          %217 = sbr.rel (%p215) target = $region20
        $region19: #{_forward_impl.1} parent=11 // pred_region
          _
        $region20: #{_forward_impl.1} parent=11 // pred_fallthru
          _
        // Predicated region
        $region21: #{_forward_impl.1} parent=11 // pred_check
          %p218 = pneg %p114
        $region22: #{_forward_impl.1} parent=11 // pred_check_branch
          %220 = sbr.rel (%p218) target = $region24
        $region23: #{_forward_impl.1} parent=11 // pred_region
          %s222 = ssub.s32 4096, 4096
          %223 = vsyncadd [#allocation9], %s222
          %s224 = sshll.u32 [#allocation10], 4
          %s225 = int_to_ptr.vmem [resolvable:$true] %s224
          %230 = dma.hbm_to_vmem [thread:$0]  %s4, 4096, %s225, [#allocation9], 128, 128, 8
        $region24: #{_forward_impl.1} parent=11 // pred_fallthru
          _
        // Predicated region
        $region25: #{_forward_impl.1} parent=11 // pred_check
          %p231 = pneg %p135
        $region26: #{_forward_impl.1} parent=11 // pred_check_branch
          %233 = sbr.rel (%p231) target = $region28
        $region27: #{_forward_impl.1} parent=11 // pred_region
          _
        $region28: #{_forward_impl.1} parent=11 // pred_fallthru
          _
      $region12: #{_forward_impl.1} parent=5 // pred_fallthru
        _
      %p234 = scmp.lt.s32.totalorder %s25, 2
      // Predicated region
      $region29: #{_forward_impl.1} parent=5 // pred_check
        %p235 = pneg %p234
      $region30: #{_forward_impl.1} parent=5 // pred_check_branch
        %237 = sbr.rel (%p235) target = $region32
      $region31: #{_forward_impl.1} parent=5 // pred_region
        // Predicated region
        $region33: #{_forward_impl.1} parent=31 // pred_check
          %p238 = pneg %p45
        $region34: #{_forward_impl.1} parent=31 // pred_check_branch
          %240 = sbr.rel (%p238) target = $region36
        $region35: #{_forward_impl.1} parent=31 // pred_region
          %s241 = sand.u32 %s35, 1
          %s242 = scalar_lea.sflag [#allocation6], %s241
          %s243 = sand.u32 %s35, 1
          %s244 = smul.addr %s243, 256
          %s245 = scalar_lea.vmem [#allocation5], %s244
          %s246 = smul.u32 16, %s25
          %s248 = ssub.s32 4096, 4096
          %249 = vsyncadd %s242, %s248
          %s250 = smul.addr %s246, 2
          %s251 = smul.addr %s250, 128
          %s252 = scalar_lea.hbm %s1, %s251
          %s253 = sshll.u32 %s245, 4
          %s254 = int_to_ptr.vmem [resolvable:$true] %s253
          %259 = dma.hbm_to_vmem [thread:$0]  %s252, 4096, %s254, %s242, 256, 256, 16
        $region36: #{_forward_impl.1} parent=31 // pred_fallthru
          _
      $region32: #{_forward_impl.1} parent=5 // pred_fallthru
        _
      %p260 = scmp.le.s32.totalorder 1, %s25
      %p261 = scmp.lt.s32.totalorder %s25, 3
      %p262 = pnand %p260, %p261
      %p263 = pneg %p262
      // Predicated region
      $region37: #{_forward_impl.1} parent=5 // pred_check
        _
      $region38: #{_forward_impl.1} parent=5 // pred_check_branch
        %265 = sbr.rel (%p262) target = $region40
      $region39: #{_forward_impl.1} parent=5 // pred_region
        %s266 = ssub.s32 %s25, 1
        %s267 = sand.u32 %s38, 1
        %s268 = scalar_lea.sflag [#allocation6], %s267
        %s269 = sand.u32 %s38, 1
        %s270 = smul.addr %s269, 256
        %s271 = scalar_lea.vmem [#allocation5], %s270
        // Predicated region
        $region41: #{_forward_impl.1} parent=39 // pred_check
          %p272 = pneg %p51
        $region42: #{_forward_impl.1} parent=39 // pred_check_branch
          %274 = sbr.rel (%p272) target = $region44
        $region43: #{_forward_impl.1} parent=39 // pred_region
          %275 = dma.done %s268, 4096
        $region44: #{_forward_impl.1} parent=39 // pred_fallthru
          _
        // Predicated region
        $region45: #{_forward_impl.1} parent=39 // pred_check
          %p276 = pneg %p72
        $region46: #{_forward_impl.1} parent=39 // pred_check_branch
          %278 = sbr.rel (%p276) target = $region48
        $region47: #{_forward_impl.1} parent=39 // pred_region
          %279 = dma.done [#allocation9], 4096
        $region48: #{_forward_impl.1} parent=39 // pred_fallthru
          _
        // Predicated region
        $region49: #{_forward_impl.1} parent=39 // pred_check
          %p280 = pneg %p114
        $region50: #{_forward_impl.1} parent=39 // pred_check_branch
          %282 = sbr.rel (%p280) target = $region52
        $region51: #{_forward_impl.1} parent=39 // pred_region
          %283 = dma.done [#allocation9], 4096
        $region52: #{_forward_impl.1} parent=39 // pred_fallthru
          _
        %s284 = sand.u32 %s38, 1
        %s285 = scalar_lea.sflag [#allocation6], %s284
        %s286 = sand.u32 %s38, 1
        %s287 = smul.addr %s286, 256
        %s288 = scalar_lea.vmem [#allocation5], %s287
        %p289 = pneg %p51
        %p290 = pneg %p48
        %p291 = pneg %p72
        %p292 = pneg %p69
        %p293 = pneg %p93
        %p294 = pneg %p90
        %p295 = pneg %p114
        %p296 = pneg %p111
        %p297 = pneg %p135
        %p298 = pneg %p132
        %p299 = pneg %p161
        %p300 = pneg %p158
        %s301 = sand.u32 %s148, 1
        %s302 = scalar_lea.sflag [#allocation7], %s301
        %s303 = sand.u32 %s148, 1
        %s304 = smul.addr %s303, 256
        %s305 = scalar_lea.vmem [#allocation11], %s304
        %p306 = pneg %p187
        %p307 = pneg %p184
        %s308 = sand.u32 %s174, 1
        %s309 = scalar_lea.sflag [#allocation13], %s308
        %s310 = sand.u32 %s174, 1
        %s311 = smul.addr %s310, 256
        %s312 = scalar_lea.vmem [#allocation12], %s311
        %s313 = smul.u32 16, %s30
        %s314 = smul.u32 16, %s30
        %s315 = smul.u32 16, %s30
        %s316 = sld [smem:[#allocation4]]
        %s317 = sand.u32 2147483647, %s316
        %v318 = vld [vmem:[%s271] sm:$0xff]
        %v319 = vld [vmem:[%s271 + $0x8] sm:$0xff]
        %v320 = vld [vmem:[%s271 + $0x10] sm:$0xff]
        %v321 = vld [vmem:[%s271 + $0x18] sm:$0xff]
        %v322 = vld [vmem:[%s271 + $0x20] sm:$0xff]
        %v323 = vld [vmem:[%s271 + $0x28] sm:$0xff]
        %v324 = vld [vmem:[%s271 + $0x30] sm:$0xff]
        %v325 = vld [vmem:[%s271 + $0x38] sm:$0xff]
        %v326 = vld [vmem:[%s271 + $0x40] sm:$0xff]
        %v327 = vld [vmem:[%s271 + $0x48] sm:$0xff]
        %v328 = vld [vmem:[%s271 + $0x50] sm:$0xff]
        %v329 = vld [vmem:[%s271 + $0x58] sm:$0xff]
        %v330 = vld [vmem:[%s271 + $0x60] sm:$0xff]
        %v331 = vld [vmem:[%s271 + $0x68] sm:$0xff]
        %v332 = vld [vmem:[%s271 + $0x70] sm:$0xff]
        %v333 = vld [vmem:[%s271 + $0x78] sm:$0xff]
        %v334 = vld [vmem:[%s271 + $0x80] sm:$0xff]
        %v335 = vld [vmem:[%s271 + $0x88] sm:$0xff]
        %v336 = vld [vmem:[%s271 + $0x90] sm:$0xff]
        %v337 = vld [vmem:[%s271 + $0x98] sm:$0xff]
        %v338 = vld [vmem:[%s271 + $0xa0] sm:$0xff]
        %v339 = vld [vmem:[%s271 + $0xa8] sm:$0xff]
        %v340 = vld [vmem:[%s271 + $0xb0] sm:$0xff]
        %v341 = vld [vmem:[%s271 + $0xb8] sm:$0xff]
        %v342 = vld [vmem:[%s271 + $0xc0] sm:$0xff]
        %v343 = vld [vmem:[%s271 + $0xc8] sm:$0xff]
        %v344 = vld [vmem:[%s271 + $0xd0] sm:$0xff]
        %v345 = vld [vmem:[%s271 + $0xd8] sm:$0xff]
        %v346 = vld [vmem:[%s271 + $0xe0] sm:$0xff]
        %v347 = vld [vmem:[%s271 + $0xe8] sm:$0xff]
        %v348 = vld [vmem:[%s271 + $0xf0] sm:$0xff]
        %v349 = vld [vmem:[%s271 + $0xf8] sm:$0xff]
        %v350 = vpack.c.bf16 %v320, %v318
        %v351 = vpack.c.bf16 %v321, %v319
        %v352 = vpack.c.bf16 %v324, %v322
        %v353 = vpack.c.bf16 %v325, %v323
        %v354 = vpack.c.bf16 %v328, %v326
        %v355 = vpack.c.bf16 %v329, %v327
        %v356 = vpack.c.bf16 %v332, %v330
        %v357 = vpack.c.bf16 %v333, %v331
        %v358 = vpack.c.bf16 %v336, %v334
        %v359 = vpack.c.bf16 %v337, %v335
        %v360 = vpack.c.bf16 %v340, %v338
        %v361 = vpack.c.bf16 %v341, %v339
        %v362 = vpack.c.bf16 %v344, %v342
        %v363 = vpack.c.bf16 %v345, %v343
        %v364 = vpack.c.bf16 %v348, %v346
        %v365 = vpack.c.bf16 %v349, %v347
        %v366 = vld [vmem:[#allocation8] sm:$0xff]
        %v367 = vld [vmem:[#allocation8 + $0x8] sm:$0xff]
        %v368 = vld [vmem:[#allocation8 + $0x10] sm:$0xff]
        %v369 = vld [vmem:[#allocation8 + $0x18] sm:$0xff]
        %v370 = vld [vmem:[#allocation8 + $0x20] sm:$0xff]
        %v371 = vld [vmem:[#allocation8 + $0x28] sm:$0xff]
        %v372 = vld [vmem:[#allocation8 + $0x30] sm:$0xff]
        %v373 = vld [vmem:[#allocation8 + $0x38] sm:$0xff]
        %v374 = vld [vmem:[#allocation8 + $0x40] sm:$0xff]
        %v375 = vld [vmem:[#allocation8 + $0x48] sm:$0xff]
        %v376 = vld [vmem:[#allocation8 + $0x50] sm:$0xff]
        %v377 = vld [vmem:[#allocation8 + $0x58] sm:$0xff]
        %v378 = vld [vmem:[#allocation8 + $0x60] sm:$0xff]
        %v379 = vld [vmem:[#allocation8 + $0x68] sm:$0xff]
        %v380 = vld [vmem:[#allocation8 + $0x70] sm:$0xff]
        %v381 = vld [vmem:[#allocation8 + $0x78] sm:$0xff]
        %v382 = vld [vmem:[#allocation8 + $0x80] sm:$0xff]
        %v383 = vld [vmem:[#allocation8 + $0x88] sm:$0xff]
        %v384 = vld [vmem:[#allocation8 + $0x90] sm:$0xff]
        %v385 = vld [vmem:[#allocation8 + $0x98] sm:$0xff]
        %v386 = vld [vmem:[#allocation8 + $0xa0] sm:$0xff]
        %v387 = vld [vmem:[#allocation8 + $0xa8] sm:$0xff]
        %v388 = vld [vmem:[#allocation8 + $0xb0] sm:$0xff]
        %v389 = vld [vmem:[#allocation8 + $0xb8] sm:$0xff]
        %v390 = vld [vmem:[#allocation8 + $0xc0] sm:$0xff]
        %v391 = vld [vmem:[#allocation8 + $0xc8] sm:$0xff]
        %v392 = vld [vmem:[#allocation8 + $0xd0] sm:$0xff]
        %v393 = vld [vmem:[#allocation8 + $0xd8] sm:$0xff]
        %v394 = vld [vmem:[#allocation8 + $0xe0] sm:$0xff]
        %v395 = vld [vmem:[#allocation8 + $0xe8] sm:$0xff]
        %v396 = vld [vmem:[#allocation8 + $0xf0] sm:$0xff]
        %v397 = vld [vmem:[#allocation8 + $0xf8] sm:$0xff]
        %v398 = vld [vmem:[%s3] sm:$0x3]
        %v400 = vlaneseq
        %v401 = vshrl.u32 %v400, 7
        %v402 = vsub.s32 0, %v401
        %v403 = vrot.slane %v398, %v402
        %v404 = vlaneseq
        %v405 = vshrl.u32 %v404, 7
        %v406 = vsub.s32 1, %v405
        %v407 = vrot.slane %v398, %v406
        %v442 = vunpack.c.l.b16 %v366
        %v443 = vunpack.c.h.b16 %v366
        %v444 = vunpack.c.l.b16 %v367
        %v445 = vunpack.c.h.b16 %v367
        %v446 = vunpack.c.l.b16 %v368
        %v447 = vunpack.c.h.b16 %v368
        %v448 = vunpack.c.l.b16 %v369
        %v449 = vunpack.c.h.b16 %v369
        %v450 = vunpack.c.l.b16 %v370
        %v451 = vunpack.c.h.b16 %v370
        %v452 = vunpack.c.l.b16 %v371
        %v453 = vunpack.c.h.b16 %v371
        %v454 = vunpack.c.l.b16 %v372
        %v455 = vunpack.c.h.b16 %v372
        %v456 = vunpack.c.l.b16 %v373
        %v457 = vunpack.c.h.b16 %v373
        %v458 = vunpack.c.l.b16 %v374
        %v459 = vunpack.c.h.b16 %v374
        %v460 = vunpack.c.l.b16 %v375
        %v461 = vunpack.c.h.b16 %v375
        %v462 = vunpack.c.l.b16 %v376
        %v463 = vunpack.c.h.b16 %v376
        %v464 = vunpack.c.l.b16 %v377
        %v465 = vunpack.c.h.b16 %v377
        %v466 = vunpack.c.l.b16 %v378
        %v467 = vunpack.c.h.b16 %v378
        %v468 = vunpack.c.l.b16 %v379
        %v469 = vunpack.c.h.b16 %v379
        %v470 = vunpack.c.l.b16 %v380
        %v471 = vunpack.c.h.b16 %v380
        %v472 = vunpack.c.l.b16 %v381
        %v473 = vunpack.c.h.b16 %v381
        %v474 = vunpack.c.l.b16 %v382
        %v475 = vunpack.c.h.b16 %v382
        %v476 = vunpack.c.l.b16 %v383
        %v477 = vunpack.c.h.b16 %v383
        %v478 = vunpack.c.l.b16 %v384
        %v479 = vunpack.c.h.b16 %v384
        %v480 = vunpack.c.l.b16 %v385
        %v481 = vunpack.c.h.b16 %v385
        %v482 = vunpack.c.l.b16 %v386
        %v483 = vunpack.c.h.b16 %v386
        %v484 = vunpack.c.l.b16 %v387
        %v485 = vunpack.c.h.b16 %v387
        %v486 = vunpack.c.l.b16 %v388
        %v487 = vunpack.c.h.b16 %v388
        %v488 = vunpack.c.l.b16 %v389
        %v489 = vunpack.c.h.b16 %v389
        %v490 = vunpack.c.l.b16 %v390
        %v491 = vunpack.c.h.b16 %v390
        %v492 = vunpack.c.l.b16 %v391
        %v493 = vunpack.c.h.b16 %v391
        %v494 = vunpack.c.l.b16 %v392
        %v495 = vunpack.c.h.b16 %v392
        %v496 = vunpack.c.l.b16 %v393
        %v497 = vunpack.c.h.b16 %v393
        %v498 = vunpack.c.l.b16 %v394
        %v499 = vunpack.c.h.b16 %v394
        %v500 = vunpack.c.l.b16 %v395
        %v501 = vunpack.c.h.b16 %v395
        %v502 = vunpack.c.l.b16 %v396
        %v503 = vunpack.c.h.b16 %v396
        %v504 = vunpack.c.l.b16 %v397
        %v505 = vunpack.c.h.b16 %v397
        %v506 = vpack.c.b16 %v444, %v442
        %v507 = vpack.c.b16 %v445, %v443
        %v508 = vpack.c.b16 %v448, %v446
        %v509 = vpack.c.b16 %v449, %v447
        %v510 = vpack.c.b16 %v452, %v450
        %v511 = vpack.c.b16 %v453, %v451
        %v512 = vpack.c.b16 %v456, %v454
        %v513 = vpack.c.b16 %v457, %v455
        %v514 = vpack.c.b16 %v460, %v458
        %v515 = vpack.c.b16 %v461, %v459
        %v516 = vpack.c.b16 %v464, %v462
        %v517 = vpack.c.b16 %v465, %v463
        %v518 = vpack.c.b16 %v468, %v466
        %v519 = vpack.c.b16 %v469, %v467
        %v520 = vpack.c.b16 %v472, %v470
        %v521 = vpack.c.b16 %v473, %v471
        %v522 = vpack.c.b16 %v476, %v474
        %v523 = vpack.c.b16 %v477, %v475
        %v524 = vpack.c.b16 %v480, %v478
        %v525 = vpack.c.b16 %v481, %v479
        %v526 = vpack.c.b16 %v484, %v482
        %v527 = vpack.c.b16 %v485, %v483
        %v528 = vpack.c.b16 %v488, %v486
        %v529 = vpack.c.b16 %v489, %v487
        %v530 = vpack.c.b16 %v492, %v490
        %v531 = vpack.c.b16 %v493, %v491
        %v532 = vpack.c.b16 %v496, %v494
        %v533 = vpack.c.b16 %v497, %v495
        %v534 = vpack.c.b16 %v500, %v498
        %v535 = vpack.c.b16 %v501, %v499
        %v536 = vpack.c.b16 %v504, %v502
        %v537 = vpack.c.b16 %v505, %v503
        %570 = vmatprep.subr.bf16.mxu0 %v507
        %571 = vmatpush1.bf16.msra.mxu0 %v506
        %572 = vmatprep.subr.bf16.mxu0 %v509
        %573 = vmatpush1.bf16.msra.mxu0 %v508
        %574 = vmatprep.subr.bf16.mxu0 %v511
        %575 = vmatpush1.bf16.msra.mxu0 %v510
        %576 = vmatprep.subr.bf16.mxu0 %v513
        %577 = vmatpush1.bf16.msra.mxu0 %v512
        %578 = vmatprep.subr.bf16.mxu0 %v515
        %579 = vmatpush1.bf16.msra.mxu0 %v514
        %580 = vmatprep.subr.bf16.mxu0 %v517
        %581 = vmatpush1.bf16.msra.mxu0 %v516
        %582 = vmatprep.subr.bf16.mxu0 %v519
        %583 = vmatpush1.bf16.msra.mxu0 %v518
        %584 = vmatprep.subr.bf16.mxu0 %v521
        %585 = vmatpush1.bf16.msra.mxu0 %v520
        %586 = vmatprep.subr.bf16.mxu0 %v523
        %587 = vmatpush1.bf16.msra.mxu0 %v522
        %588 = vmatprep.subr.bf16.mxu0 %v525
        %589 = vmatpush1.bf16.msra.mxu0 %v524
        %590 = vmatprep.subr.bf16.mxu0 %v527
        %591 = vmatpush1.bf16.msra.mxu0 %v526
        %592 = vmatprep.subr.bf16.mxu0 %v529
        %593 = vmatpush1.bf16.msra.mxu0 %v528
        %594 = vmatprep.subr.bf16.mxu0 %v531
        %595 = vmatpush1.bf16.msra.mxu0 %v530
        %596 = vmatprep.subr.bf16.mxu0 %v533
        %597 = vmatpush1.bf16.msra.mxu0 %v532
        %598 = vmatprep.subr.bf16.mxu0 %v535
        %599 = vmatpush1.bf16.msra.mxu0 %v534
        %600 = vmatprep.subr.bf16.mxu0 %v537
        %601 = vmatpush1.bf16.msra.mxu0 %v536
        %602 = vmatprep.mubr.bf16.mxu0 %v351
        %603 = vmatmul.mubr.bf16.gmra.mrb[0].mxu0 %v350
        %v604 = vpop.f32.mrb[0].mxu0
        %v605 = vadd.f32 %v403, %v604
        %v606 = vpop.f32.mrb[0].mxu0
        %v607 = vadd.f32 %v407, %v606
        %v608 = vpop.f32.mrb[0].mxu0
        %v609 = vadd.f32 %v403, %v608
        %v610 = vpop.f32.mrb[0].mxu0
        %v611 = vadd.f32 %v407, %v610
        %612 = vmatprep.mubr.bf16.mxu0 %v353
        %613 = vmatmul.mubr.bf16.gmra.mrb[0].mxu0 %v352
        %v614 = vpop.f32.mrb[0].mxu0
        %v615 = vadd.f32 %v403, %v614
        %v616 = vpop.f32.mrb[0].mxu0
        %v617 = vadd.f32 %v407, %v616
        %v618 = vpop.f32.mrb[0].mxu0
        %v619 = vadd.f32 %v403, %v618
        %v620 = vpop.f32.mrb[0].mxu0
        %v621 = vadd.f32 %v407, %v620
        %622 = vmatprep.mubr.bf16.mxu0 %v355
        %623 = vmatmul.mubr.bf16.gmra.mrb[0].mxu0 %v354
        %v624 = vpop.f32.mrb[0].mxu0
        %v625 = vadd.f32 %v403, %v624
        %v626 = vpop.f32.mrb[0].mxu0
        %v627 = vadd.f32 %v407, %v626
        %v628 = vpop.f32.mrb[0].mxu0
        %v629 = vadd.f32 %v403, %v628
        %v630 = vpop.f32.mrb[0].mxu0
        %v631 = vadd.f32 %v407, %v630
        %632 = vmatprep.mubr.bf16.mxu0 %v357
        %633 = vmatmul.mubr.bf16.gmra.mrb[0].mxu0 %v356
        %v634 = vpop.f32.mrb[0].mxu0
        %v635 = vadd.f32 %v403, %v634
        %v636 = vpop.f32.mrb[0].mxu0
        %v637 = vadd.f32 %v407, %v636
        %v638 = vpop.f32.mrb[0].mxu0
        %v639 = vadd.f32 %v403, %v638
        %v640 = vpop.f32.mrb[0].mxu0
        %v641 = vadd.f32 %v407, %v640
        %642 = vmatprep.mubr.bf16.mxu0 %v359
        %643 = vmatmul.mubr.bf16.gmra.mrb[0].mxu0 %v358
        %v644 = vpop.f32.mrb[0].mxu0
        %v645 = vadd.f32 %v403, %v644
        %v646 = vpop.f32.mrb[0].mxu0
        %v647 = vadd.f32 %v407, %v646
        %v648 = vpop.f32.mrb[0].mxu0
        %v649 = vadd.f32 %v403, %v648
        %v650 = vpop.f32.mrb[0].mxu0
        %v651 = vadd.f32 %v407, %v650
        %652 = vmatprep.mubr.bf16.mxu0 %v361
        %653 = vmatmul.mubr.bf16.gmra.mrb[0].mxu0 %v360
        %v654 = vpop.f32.mrb[0].mxu0
        %v655 = vadd.f32 %v403, %v654
        %v656 = vpop.f32.mrb[0].mxu0
        %v657 = vadd.f32 %v407, %v656
        %v658 = vpop.f32.mrb[0].mxu0
        %v659 = vadd.f32 %v403, %v658
        %v660 = vpop.f32.mrb[0].mxu0
        %v661 = vadd.f32 %v407, %v660
        %662 = vmatprep.mubr.bf16.mxu0 %v363
        %663 = vmatmul.mubr.bf16.gmra.mrb[0].mxu0 %v362
        %v664 = vpop.f32.mrb[0].mxu0
        %v665 = vadd.f32 %v403, %v664
        %v666 = vpop.f32.mrb[0].mxu0
        %v667 = vadd.f32 %v407, %v666
        %v668 = vpop.f32.mrb[0].mxu0
        %v669 = vadd.f32 %v403, %v668
        %v670 = vpop.f32.mrb[0].mxu0
        %v671 = vadd.f32 %v407, %v670
        %672 = vmatprep.mubr.bf16.mxu0 %v365
        %673 = vmatmul.mubr.bf16.gmra.mrb[0].mxu0 %v364
        %v674 = vpop.f32.mrb[0].mxu0
        %v675 = vadd.f32 %v403, %v674
        %v676 = vpop.f32.mrb[0].mxu0
        %v677 = vadd.f32 %v407, %v676
        %v678 = vpop.f32.mrb[0].mxu0
        %v679 = vadd.f32 %v403, %v678
        %v680 = vpop.f32.mrb[0].mxu0
        %v681 = vadd.f32 %v407, %v680
        %682 = vdwg.mxu0
        %v683 = vmul.f32 %v605, %v605
        %v684 = vmul.f32 %v609, %v609
        %v685 = vmul.f32 %v615, %v615
        %v686 = vmul.f32 %v619, %v619
        %v687 = vmul.f32 %v625, %v625
        %v688 = vmul.f32 %v629, %v629
        %v689 = vmul.f32 %v635, %v635
        %v690 = vmul.f32 %v639, %v639
        %v691 = vmul.f32 %v645, %v645
        %v692 = vmul.f32 %v649, %v649
        %v693 = vmul.f32 %v655, %v655
        %v694 = vmul.f32 %v659, %v659
        %v695 = vmul.f32 %v665, %v665
        %v696 = vmul.f32 %v669, %v669
        %v697 = vmul.f32 %v675, %v675
        %v698 = vmul.f32 %v679, %v679
        %v699 = vmul.f32 %v607, %v607
        %v700 = vmul.f32 %v611, %v611
        %v701 = vmul.f32 %v617, %v617
        %v702 = vmul.f32 %v621, %v621
        %v703 = vmul.f32 %v627, %v627
        %v704 = vmul.f32 %v631, %v631
        %v705 = vmul.f32 %v637, %v637
        %v706 = vmul.f32 %v641, %v641
        %v707 = vmul.f32 %v647, %v647
        %v708 = vmul.f32 %v651, %v651
        %v709 = vmul.f32 %v657, %v657
        %v710 = vmul.f32 %v661, %v661
        %v711 = vmul.f32 %v667, %v667
        %v712 = vmul.f32 %v671, %v671
        %v713 = vmul.f32 %v677, %v677
        %v714 = vmul.f32 %v681, %v681
        %v715 = vadd.f32 %v683, %v699
        %v716 = vadd.f32 %v684, %v700
        %v717 = vadd.f32 %v685, %v701
        %v718 = vadd.f32 %v686, %v702
        %v719 = vadd.f32 %v687, %v703
        %v720 = vadd.f32 %v688, %v704
        %v721 = vadd.f32 %v689, %v705
        %v722 = vadd.f32 %v690, %v706
        %v723 = vadd.f32 %v691, %v707
        %v724 = vadd.f32 %v692, %v708
        %v725 = vadd.f32 %v693, %v709
        %v726 = vadd.f32 %v694, %v710
        %v727 = vadd.f32 %v695, %v711
        %v728 = vadd.f32 %v696, %v712
        %v729 = vadd.f32 %v697, %v713
        %v730 = vadd.f32 %v698, %v714
        %v731 = vrsqrt.pop %v715
        %v732 = vrsqrt.pop %v716
        %v733 = vrsqrt.pop %v717
        %v734 = vrsqrt.pop %v718
        %v735 = vrsqrt.pop %v719
        %v736 = vrsqrt.pop %v720
        %v737 = vrsqrt.pop %v721
        %v738 = vrsqrt.pop %v722
        %v739 = vrsqrt.pop %v723
        %v740 = vrsqrt.pop %v724
        %v741 = vrsqrt.pop %v725
        %v742 = vrsqrt.pop %v726
        %v743 = vrsqrt.pop %v727
        %v744 = vrsqrt.pop %v728
        %v745 = vrsqrt.pop %v729
        %v746 = vrsqrt.pop %v730
        %v747 = vstv %s317
        %v748 = vmul.f32 %v747, %v731
        %v749 = vmul.f32 %v747, %v732
        %v750 = vmul.f32 %v747, %v733
        %v751 = vmul.f32 %v747, %v734
        %v752 = vmul.f32 %v747, %v735
        %v753 = vmul.f32 %v747, %v736
        %v754 = vmul.f32 %v747, %v737
        %v755 = vmul.f32 %v747, %v738
        %v756 = vmul.f32 %v747, %v739
        %v757 = vmul.f32 %v747, %v740
        %v758 = vmul.f32 %v747, %v741
        %v759 = vmul.f32 %v747, %v742
        %v760 = vmul.f32 %v747, %v743
        %v761 = vmul.f32 %v747, %v744
        %v762 = vmul.f32 %v747, %v745
        %v763 = vmul.f32 %v747, %v746
        %v764 = vsub.f32 1.0, %v748
        %v765 = vsub.f32 1.0, %v749
        %v766 = vsub.f32 1.0, %v750
        %v767 = vsub.f32 1.0, %v751
        %v768 = vsub.f32 1.0, %v752
        %v769 = vsub.f32 1.0, %v753
        %v770 = vsub.f32 1.0, %v754
        %v771 = vsub.f32 1.0, %v755
        %v772 = vsub.f32 1.0, %v756
        %v773 = vsub.f32 1.0, %v757
        %v774 = vsub.f32 1.0, %v758
        %v775 = vsub.f32 1.0, %v759
        %v776 = vsub.f32 1.0, %v760
        %v777 = vsub.f32 1.0, %v761
        %v778 = vsub.f32 1.0, %v762
        %v779 = vsub.f32 1.0, %v763
        %v780 = vmax.f32 %v764, 0.0
        %v781 = vmax.f32 %v765, 0.0
        %v782 = vmax.f32 %v766, 0.0
        %v783 = vmax.f32 %v767, 0.0
        %v784 = vmax.f32 %v768, 0.0
        %v785 = vmax.f32 %v769, 0.0
        %v786 = vmax.f32 %v770, 0.0
        %v787 = vmax.f32 %v771, 0.0
        %v788 = vmax.f32 %v772, 0.0
        %v789 = vmax.f32 %v773, 0.0
        %v790 = vmax.f32 %v774, 0.0
        %v791 = vmax.f32 %v775, 0.0
        %v792 = vmax.f32 %v776, 0.0
        %v793 = vmax.f32 %v777, 0.0
        %v794 = vmax.f32 %v778, 0.0
        %v795 = vmax.f32 %v779, 0.0
        %vm796 = vcmp.gt.f32.partialorder %v715, 0.0
        %vm797 = vcmp.gt.f32.partialorder %v716, 0.0
        %vm798 = vcmp.gt.f32.partialorder %v717, 0.0
        %vm799 = vcmp.gt.f32.partialorder %v718, 0.0
        %vm800 = vcmp.gt.f32.partialorder %v719, 0.0
        %vm801 = vcmp.gt.f32.partialorder %v720, 0.0
        %vm802 = vcmp.gt.f32.partialorder %v721, 0.0
        %vm803 = vcmp.gt.f32.partialorder %v722, 0.0
        %vm804 = vcmp.gt.f32.partialorder %v723, 0.0
        %vm805 = vcmp.gt.f32.partialorder %v724, 0.0
        %vm806 = vcmp.gt.f32.partialorder %v725, 0.0
        %vm807 = vcmp.gt.f32.partialorder %v726, 0.0
        %vm808 = vcmp.gt.f32.partialorder %v727, 0.0
        %vm809 = vcmp.gt.f32.partialorder %v728, 0.0
        %vm810 = vcmp.gt.f32.partialorder %v729, 0.0
        %vm811 = vcmp.gt.f32.partialorder %v730, 0.0
        %v812 = vsel %vm796, %v780, 0.0
        %v813 = vsel %vm797, %v781, 0.0
        %v814 = vsel %vm798, %v782, 0.0
        %v815 = vsel %vm799, %v783, 0.0
        %v816 = vsel %vm800, %v784, 0.0
        %v817 = vsel %vm801, %v785, 0.0
        %v818 = vsel %vm802, %v786, 0.0
        %v819 = vsel %vm803, %v787, 0.0
        %v820 = vsel %vm804, %v788, 0.0
        %v821 = vsel %vm805, %v789, 0.0
        %v822 = vsel %vm806, %v790, 0.0
        %v823 = vsel %vm807, %v791, 0.0
        %v824 = vsel %vm808, %v792, 0.0
        %v825 = vsel %vm809, %v793, 0.0
        %v826 = vsel %vm810, %v794, 0.0
        %v827 = vsel %vm811, %v795, 0.0
        %v828 = vmul.f32 %v605, %v812
        %v829 = vmul.f32 %v609, %v813
        %v830 = vmul.f32 %v615, %v814
        %v831 = vmul.f32 %v619, %v815
        %v832 = vmul.f32 %v625, %v816
        %v833 = vmul.f32 %v629, %v817
        %v834 = vmul.f32 %v635, %v818
        %v835 = vmul.f32 %v639, %v819
        %v836 = vmul.f32 %v645, %v820
        %v837 = vmul.f32 %v649, %v821
        %v838 = vmul.f32 %v655, %v822
        %v839 = vmul.f32 %v659, %v823
        %v840 = vmul.f32 %v665, %v824
        %v841 = vmul.f32 %v669, %v825
        %v842 = vmul.f32 %v675, %v826
        %v843 = vmul.f32 %v679, %v827
        %v844 = vmul.f32 %v607, %v812
        %v845 = vmul.f32 %v611, %v813
        %v846 = vmul.f32 %v617, %v814
        %v847 = vmul.f32 %v621, %v815
        %v848 = vmul.f32 %v627, %v816
        %v849 = vmul.f32 %v631, %v817
        %v850 = vmul.f32 %v637, %v818
        %v851 = vmul.f32 %v641, %v819
        %v852 = vmul.f32 %v647, %v820
        %v853 = vmul.f32 %v651, %v821
        %v854 = vmul.f32 %v657, %v822
        %v855 = vmul.f32 %v661, %v823
        %v856 = vmul.f32 %v667, %v824
        %v857 = vmul.f32 %v671, %v825
        %v858 = vmul.f32 %v677, %v826
        %v859 = vmul.f32 %v681, %v827
        %860 = vst [vmem:[%s312] sm:$0xff] %v828
        %861 = vst [vmem:[%s312 + $0x10] sm:$0xff] %v829
        %862 = vst [vmem:[%s312 + $0x20] sm:$0xff] %v830
        %863 = vst [vmem:[%s312 + $0x30] sm:$0xff] %v831
        %864 = vst [vmem:[%s312 + $0x40] sm:$0xff] %v832
        %865 = vst [vmem:[%s312 + $0x50] sm:$0xff] %v833
        %866 = vst [vmem:[%s312 + $0x60] sm:$0xff] %v834
        %867 = vst [vmem:[%s312 + $0x70] sm:$0xff] %v835
        %868 = vst [vmem:[%s312 + $0x80] sm:$0xff] %v836
        %869 = vst [vmem:[%s312 + $0x90] sm:$0xff] %v837
        %870 = vst [vmem:[%s312 + $0xa0] sm:$0xff] %v838
        %871 = vst [vmem:[%s312 + $0xb0] sm:$0xff] %v839
        %872 = vst [vmem:[%s312 + $0xc0] sm:$0xff] %v840
        %873 = vst [vmem:[%s312 + $0xd0] sm:$0xff] %v841
        %874 = vst [vmem:[%s312 + $0xe0] sm:$0xff] %v842
        %875 = vst [vmem:[%s312 + $0xf0] sm:$0xff] %v843
        %876 = vst [vmem:[%s312 + $0x8] sm:$0xff] %v844
        %877 = vst [vmem:[%s312 + $0x18] sm:$0xff] %v845
        %878 = vst [vmem:[%s312 + $0x28] sm:$0xff] %v846
        %879 = vst [vmem:[%s312 + $0x38] sm:$0xff] %v847
        %880 = vst [vmem:[%s312 + $0x48] sm:$0xff] %v848
        %881 = vst [vmem:[%s312 + $0x58] sm:$0xff] %v849
        %882 = vst [vmem:[%s312 + $0x68] sm:$0xff] %v850
        %883 = vst [vmem:[%s312 + $0x78] sm:$0xff] %v851
        %884 = vst [vmem:[%s312 + $0x88] sm:$0xff] %v852
        %885 = vst [vmem:[%s312 + $0x98] sm:$0xff] %v853
        %886 = vst [vmem:[%s312 + $0xa8] sm:$0xff] %v854
        %887 = vst [vmem:[%s312 + $0xb8] sm:$0xff] %v855
        %888 = vst [vmem:[%s312 + $0xc8] sm:$0xff] %v856
        %889 = vst [vmem:[%s312 + $0xd8] sm:$0xff] %v857
        %890 = vst [vmem:[%s312 + $0xe8] sm:$0xff] %v858
        %891 = vst [vmem:[%s312 + $0xf8] sm:$0xff] %v859
        %v892 = vpack.c.bf16 %v829, %v828
        %v893 = vpack.c.bf16 %v831, %v830
        %v894 = vpack.c.bf16 %v833, %v832
        %v895 = vpack.c.bf16 %v835, %v834
        %v896 = vpack.c.bf16 %v837, %v836
        %v897 = vpack.c.bf16 %v839, %v838
        %v898 = vpack.c.bf16 %v841, %v840
        %v899 = vpack.c.bf16 %v843, %v842
        %900 = vst [vmem:[#allocation2] sm:$0xff] %v892
        %901 = vst [vmem:[#allocation2 + $0x10] sm:$0xff] %v893
        %902 = vst [vmem:[#allocation2 + $0x20] sm:$0xff] %v894
        %903 = vst [vmem:[#allocation2 + $0x30] sm:$0xff] %v895
        %904 = vst [vmem:[#allocation2 + $0x40] sm:$0xff] %v896
        %905 = vst [vmem:[#allocation2 + $0x50] sm:$0xff] %v897
        %906 = vst [vmem:[#allocation2 + $0x60] sm:$0xff] %v898
        %907 = vst [vmem:[#allocation2 + $0x70] sm:$0xff] %v899
        %v908 = vpack.c.bf16 %v845, %v844
        %v909 = vpack.c.bf16 %v847, %v846
        %v910 = vpack.c.bf16 %v849, %v848
        %v911 = vpack.c.bf16 %v851, %v850
        %v912 = vpack.c.bf16 %v853, %v852
        %v913 = vpack.c.bf16 %v855, %v854
        %v914 = vpack.c.bf16 %v857, %v856
        %v915 = vpack.c.bf16 %v859, %v858
        %916 = vst [vmem:[#allocation2 + $0x8] sm:$0xff] %v908
        %917 = vst [vmem:[#allocation2 + $0x18] sm:$0xff] %v909
        %918 = vst [vmem:[#allocation2 + $0x28] sm:$0xff] %v910
        %919 = vst [vmem:[#allocation2 + $0x38] sm:$0xff] %v911
        %920 = vst [vmem:[#allocation2 + $0x48] sm:$0xff] %v912
        %921 = vst [vmem:[#allocation2 + $0x58] sm:$0xff] %v913
        %922 = vst [vmem:[#allocation2 + $0x68] sm:$0xff] %v914
        %923 = vst [vmem:[#allocation2 + $0x78] sm:$0xff] %v915
        %v924 = vld [vmem:[#allocation2] sm:$0xff]
        %v925 = vld [vmem:[#allocation2 + $0x8] sm:$0xff]
        %v926 = vld [vmem:[#allocation2 + $0x10] sm:$0xff]
        %v927 = vld [vmem:[#allocation2 + $0x18] sm:$0xff]
        %v928 = vld [vmem:[#allocation2 + $0x20] sm:$0xff]
        %v929 = vld [vmem:[#allocation2 + $0x28] sm:$0xff]
        %v930 = vld [vmem:[#allocation2 + $0x30] sm:$0xff]
        %v931 = vld [vmem:[#allocation2 + $0x38] sm:$0xff]
        %v932 = vld [vmem:[#allocation2 + $0x40] sm:$0xff]
        %v933 = vld [vmem:[#allocation2 + $0x48] sm:$0xff]
        %v934 = vld [vmem:[#allocation2 + $0x50] sm:$0xff]
        %v935 = vld [vmem:[#allocation2 + $0x58] sm:$0xff]
        %v936 = vld [vmem:[#allocation2 + $0x60] sm:$0xff]
        %v937 = vld [vmem:[#allocation2 + $0x68] sm:$0xff]
        %v938 = vld [vmem:[#allocation2 + $0x70] sm:$0xff]
        %v939 = vld [vmem:[#allocation2 + $0x78] sm:$0xff]
        %v940 = vld [vmem:[#allocation10] sm:$0xff]
        %v941 = vld [vmem:[#allocation10 + $0x8] sm:$0xff]
        %v942 = vld [vmem:[#allocation10 + $0x10] sm:$0xff]
        %v943 = vld [vmem:[#allocation10 + $0x18] sm:$0xff]
        %v944 = vld [vmem:[#allocation10 + $0x20] sm:$0xff]
        %v945 = vld [vmem:[#allocation10 + $0x28] sm:$0xff]
        %v946 = vld [vmem:[#allocation10 + $0x30] sm:$0xff]
        %v947 = vld [vmem:[#allocation10 + $0x38] sm:$0xff]
        %v948 = vld [vmem:[#allocation10 + $0x40] sm:$0xff]
        %v949 = vld [vmem:[#allocation10 + $0x48] sm:$0xff]
        %v950 = vld [vmem:[#allocation10 + $0x50] sm:$0xff]
        %v951 = vld [vmem:[#allocation10 + $0x58] sm:$0xff]
        %v952 = vld [vmem:[#allocation10 + $0x60] sm:$0xff]
        %v953 = vld [vmem:[#allocation10 + $0x68] sm:$0xff]
        %v954 = vld [vmem:[#allocation10 + $0x70] sm:$0xff]
        %v955 = vld [vmem:[#allocation10 + $0x78] sm:$0xff]
        %v956 = vld [vmem:[#allocation10 + $0x80] sm:$0xff]
        %v957 = vld [vmem:[#allocation10 + $0x88] sm:$0xff]
        %v958 = vld [vmem:[#allocation10 + $0x90] sm:$0xff]
        %v959 = vld [vmem:[#allocation10 + $0x98] sm:$0xff]
        %v960 = vld [vmem:[#allocation10 + $0xa0] sm:$0xff]
        %v961 = vld [vmem:[#allocation10 + $0xa8] sm:$0xff]
        %v962 = vld [vmem:[#allocation10 + $0xb0] sm:$0xff]
        %v963 = vld [vmem:[#allocation10 + $0xb8] sm:$0xff]
        %v964 = vld [vmem:[#allocation10 + $0xc0] sm:$0xff]
        %v965 = vld [vmem:[#allocation10 + $0xc8] sm:$0xff]
        %v966 = vld [vmem:[#allocation10 + $0xd0] sm:$0xff]
        %v967 = vld [vmem:[#allocation10 + $0xd8] sm:$0xff]
        %v968 = vld [vmem:[#allocation10 + $0xe0] sm:$0xff]
        %v969 = vld [vmem:[#allocation10 + $0xe8] sm:$0xff]
        %v970 = vld [vmem:[#allocation10 + $0xf0] sm:$0xff]
        %v971 = vld [vmem:[#allocation10 + $0xf8] sm:$0xff]
        %v972 = vld [vmem:[%s5] sm:$0x3]
        %v974 = vlaneseq
        %v975 = vshrl.u32 %v974, 7
        %v976 = vsub.s32 0, %v975
        %v977 = vrot.slane %v972, %v976
        %v978 = vlaneseq
        %v979 = vshrl.u32 %v978, 7
        %v980 = vsub.s32 1, %v979
        %v981 = vrot.slane %v972, %v980
        %v1016 = vunpack.c.l.b16 %v940
        %v1017 = vunpack.c.h.b16 %v940
        %v1018 = vunpack.c.l.b16 %v941
        %v1019 = vunpack.c.h.b16 %v941
        %v1020 = vunpack.c.l.b16 %v942
        %v1021 = vunpack.c.h.b16 %v942
        %v1022 = vunpack.c.l.b16 %v943
        %v1023 = vunpack.c.h.b16 %v943
        %v1024 = vunpack.c.l.b16 %v944
        %v1025 = vunpack.c.h.b16 %v944
        %v1026 = vunpack.c.l.b16 %v945
        %v1027 = vunpack.c.h.b16 %v945
        %v1028 = vunpack.c.l.b16 %v946
        %v1029 = vunpack.c.h.b16 %v946
        %v1030 = vunpack.c.l.b16 %v947
        %v1031 = vunpack.c.h.b16 %v947
        %v1032 = vunpack.c.l.b16 %v948
        %v1033 = vunpack.c.h.b16 %v948
        %v1034 = vunpack.c.l.b16 %v949
        %v1035 = vunpack.c.h.b16 %v949
        %v1036 = vunpack.c.l.b16 %v950
        %v1037 = vunpack.c.h.b16 %v950
        %v1038 = vunpack.c.l.b16 %v951
        %v1039 = vunpack.c.h.b16 %v951
        %v1040 = vunpack.c.l.b16 %v952
        %v1041 = vunpack.c.h.b16 %v952
        %v1042 = vunpack.c.l.b16 %v953
        %v1043 = vunpack.c.h.b16 %v953
        %v1044 = vunpack.c.l.b16 %v954
        %v1045 = vunpack.c.h.b16 %v954
        %v1046 = vunpack.c.l.b16 %v955
        %v1047 = vunpack.c.h.b16 %v955
        %v1048 = vunpack.c.l.b16 %v956
        %v1049 = vunpack.c.h.b16 %v956
        %v1050 = vunpack.c.l.b16 %v957
        %v1051 = vunpack.c.h.b16 %v957
        %v1052 = vunpack.c.l.b16 %v958
        %v1053 = vunpack.c.h.b16 %v958
        %v1054 = vunpack.c.l.b16 %v959
        %v1055 = vunpack.c.h.b16 %v959
        %v1056 = vunpack.c.l.b16 %v960
        %v1057 = vunpack.c.h.b16 %v960
        %v1058 = vunpack.c.l.b16 %v961
        %v1059 = vunpack.c.h.b16 %v961
        %v1060 = vunpack.c.l.b16 %v962
        %v1061 = vunpack.c.h.b16 %v962
        %v1062 = vunpack.c.l.b16 %v963
        %v1063 = vunpack.c.h.b16 %v963
        %v1064 = vunpack.c.l.b16 %v964
        %v1065 = vunpack.c.h.b16 %v964
        %v1066 = vunpack.c.l.b16 %v965
        %v1067 = vunpack.c.h.b16 %v965
        %v1068 = vunpack.c.l.b16 %v966
        %v1069 = vunpack.c.h.b16 %v966
        %v1070 = vunpack.c.l.b16 %v967
        %v1071 = vunpack.c.h.b16 %v967
        %v1072 = vunpack.c.l.b16 %v968
        %v1073 = vunpack.c.h.b16 %v968
        %v1074 = vunpack.c.l.b16 %v969
        %v1075 = vunpack.c.h.b16 %v969
        %v1076 = vunpack.c.l.b16 %v970
        %v1077 = vunpack.c.h.b16 %v970
        %v1078 = vunpack.c.l.b16 %v971
        %v1079 = vunpack.c.h.b16 %v971
        %v1080 = vpack.c.b16 %v1018, %v1016
        %v1081 = vpack.c.b16 %v1019, %v1017
        %v1082 = vpack.c.b16 %v1022, %v1020
        %v1083 = vpack.c.b16 %v1023, %v1021
        %v1084 = vpack.c.b16 %v1026, %v1024
        %v1085 = vpack.c.b16 %v1027, %v1025
        %v1086 = vpack.c.b16 %v1030, %v1028
        %v1087 = vpack.c.b16 %v1031, %v1029
        %v1088 = vpack.c.b16 %v1034, %v1032
        %v1089 = vpack.c.b16 %v1035, %v1033
        %v1090 = vpack.c.b16 %v1038, %v1036
        %v1091 = vpack.c.b16 %v1039, %v1037
        %v1092 = vpack.c.b16 %v1042, %v1040
        %v1093 = vpack.c.b16 %v1043, %v1041
        %v1094 = vpack.c.b16 %v1046, %v1044
        %v1095 = vpack.c.b16 %v1047, %v1045
        %v1096 = vpack.c.b16 %v1050, %v1048
        %v1097 = vpack.c.b16 %v1051, %v1049
        %v1098 = vpack.c.b16 %v1054, %v1052
        %v1099 = vpack.c.b16 %v1055, %v1053
        %v1100 = vpack.c.b16 %v1058, %v1056
        %v1101 = vpack.c.b16 %v1059, %v1057
        %v1102 = vpack.c.b16 %v1062, %v1060
        %v1103 = vpack.c.b16 %v1063, %v1061
        %v1104 = vpack.c.b16 %v1066, %v1064
        %v1105 = vpack.c.b16 %v1067, %v1065
        %v1106 = vpack.c.b16 %v1070, %v1068
        %v1107 = vpack.c.b16 %v1071, %v1069
        %v1108 = vpack.c.b16 %v1074, %v1072
        %v1109 = vpack.c.b16 %v1075, %v1073
        %v1110 = vpack.c.b16 %v1078, %v1076
        %v1111 = vpack.c.b16 %v1079, %v1077
        %1144 = vmatprep.subr.bf16.mxu0 %v1081
        %1145 = vmatpush1.bf16.msra.mxu0 %v1080
        %1146 = vmatprep.subr.bf16.mxu0 %v1083
        %1147 = vmatpush1.bf16.msra.mxu0 %v1082
        %1148 = vmatprep.subr.bf16.mxu0 %v1085
        %1149 = vmatpush1.bf16.msra.mxu0 %v1084
        %1150 = vmatprep.subr.bf16.mxu0 %v1087
        %1151 = vmatpush1.bf16.msra.mxu0 %v1086
        %1152 = vmatprep.subr.bf16.mxu0 %v1089
        %1153 = vmatpush1.bf16.msra.mxu0 %v1088
        %1154 = vmatprep.subr.bf16.mxu0 %v1091
        %1155 = vmatpush1.bf16.msra.mxu0 %v1090
        %1156 = vmatprep.subr.bf16.mxu0 %v1093
        %1157 = vmatpush1.bf16.msra.mxu0 %v1092
        %1158 = vmatprep.subr.bf16.mxu0 %v1095
        %1159 = vmatpush1.bf16.msra.mxu0 %v1094
        %1160 = vmatprep.subr.bf16.mxu0 %v1097
        %1161 = vmatpush1.bf16.msra.mxu0 %v1096
        %1162 = vmatprep.subr.bf16.mxu0 %v1099
        %1163 = vmatpush1.bf16.msra.mxu0 %v1098
        %1164 = vmatprep.subr.bf16.mxu0 %v1101
        %1165 = vmatpush1.bf16.msra.mxu0 %v1100
        %1166 = vmatprep.subr.bf16.mxu0 %v1103
        %1167 = vmatpush1.bf16.msra.mxu0 %v1102
        %1168 = vmatprep.subr.bf16.mxu0 %v1105
        %1169 = vmatpush1.bf16.msra.mxu0 %v1104
        %1170 = vmatprep.subr.bf16.mxu0 %v1107
        %1171 = vmatpush1.bf16.msra.mxu0 %v1106
        %1172 = vmatprep.subr.bf16.mxu0 %v1109
        %1173 = vmatpush1.bf16.msra.mxu0 %v1108
        %1174 = vmatprep.subr.bf16.mxu0 %v1111
        %1175 = vmatpush1.bf16.msra.mxu0 %v1110
        %1176 = vmatprep.mubr.bf16.mxu0 %v925
        %1177 = vmatmul.mubr.bf16.gmra.mrb[0].mxu0 %v924
        %v1178 = vpop.f32.mrb[0].mxu0
        %v1179 = vadd.f32 %v977, %v1178
        %v1180 = vpop.f32.mrb[0].mxu0
        %v1181 = vadd.f32 %v981, %v1180
        %v1182 = vpop.f32.mrb[0].mxu0
        %v1183 = vadd.f32 %v977, %v1182
        %v1184 = vpop.f32.mrb[0].mxu0
        %v1185 = vadd.f32 %v981, %v1184
        %1186 = vmatprep.mubr.bf16.mxu0 %v927
        %1187 = vmatmul.mubr.bf16.gmra.mrb[0].mxu0 %v926
        %v1188 = vpop.f32.mrb[0].mxu0
        %v1189 = vadd.f32 %v977, %v1188
        %v1190 = vpop.f32.mrb[0].mxu0
        %v1191 = vadd.f32 %v981, %v1190
        %v1192 = vpop.f32.mrb[0].mxu0
        %v1193 = vadd.f32 %v977, %v1192
        %v1194 = vpop.f32.mrb[0].mxu0
        %v1195 = vadd.f32 %v981, %v1194
        %1196 = vmatprep.mubr.bf16.mxu0 %v929
        %1197 = vmatmul.mubr.bf16.gmra.mrb[0].mxu0 %v928
        %v1198 = vpop.f32.mrb[0].mxu0
        %v1199 = vadd.f32 %v977, %v1198
        %v1200 = vpop.f32.mrb[0].mxu0
        %v1201 = vadd.f32 %v981, %v1200
        %v1202 = vpop.f32.mrb[0].mxu0
        %v1203 = vadd.f32 %v977, %v1202
        %v1204 = vpop.f32.mrb[0].mxu0
        %v1205 = vadd.f32 %v981, %v1204
        %1206 = vmatprep.mubr.bf16.mxu0 %v931
        %1207 = vmatmul.mubr.bf16.gmra.mrb[0].mxu0 %v930
        %v1208 = vpop.f32.mrb[0].mxu0
        %v1209 = vadd.f32 %v977, %v1208
        %v1210 = vpop.f32.mrb[0].mxu0
        %v1211 = vadd.f32 %v981, %v1210
        %v1212 = vpop.f32.mrb[0].mxu0
        %v1213 = vadd.f32 %v977, %v1212
        %v1214 = vpop.f32.mrb[0].mxu0
        %v1215 = vadd.f32 %v981, %v1214
        %1216 = vmatprep.mubr.bf16.mxu0 %v933
        %1217 = vmatmul.mubr.bf16.gmra.mrb[0].mxu0 %v932
        %v1218 = vpop.f32.mrb[0].mxu0
        %v1219 = vadd.f32 %v977, %v1218
        %v1220 = vpop.f32.mrb[0].mxu0
        %v1221 = vadd.f32 %v981, %v1220
        %v1222 = vpop.f32.mrb[0].mxu0
        %v1223 = vadd.f32 %v977, %v1222
        %v1224 = vpop.f32.mrb[0].mxu0
        %v1225 = vadd.f32 %v981, %v1224
        %1226 = vmatprep.mubr.bf16.mxu0 %v935
        %1227 = vmatmul.mubr.bf16.gmra.mrb[0].mxu0 %v934
        %v1228 = vpop.f32.mrb[0].mxu0
        %v1229 = vadd.f32 %v977, %v1228
        %v1230 = vpop.f32.mrb[0].mxu0
        %v1231 = vadd.f32 %v981, %v1230
        %v1232 = vpop.f32.mrb[0].mxu0
        %v1233 = vadd.f32 %v977, %v1232
        %v1234 = vpop.f32.mrb[0].mxu0
        %v1235 = vadd.f32 %v981, %v1234
        %1236 = vmatprep.mubr.bf16.mxu0 %v937
        %1237 = vmatmul.mubr.bf16.gmra.mrb[0].mxu0 %v936
        %v1238 = vpop.f32.mrb[0].mxu0
        %v1239 = vadd.f32 %v977, %v1238
        %v1240 = vpop.f32.mrb[0].mxu0
        %v1241 = vadd.f32 %v981, %v1240
        %v1242 = vpop.f32.mrb[0].mxu0
        %v1243 = vadd.f32 %v977, %v1242
        %v1244 = vpop.f32.mrb[0].mxu0
        %v1245 = vadd.f32 %v981, %v1244
        %1246 = vmatprep.mubr.bf16.mxu0 %v939
        %1247 = vmatmul.mubr.bf16.gmra.mrb[0].mxu0 %v938
        %v1248 = vpop.f32.mrb[0].mxu0
        %v1249 = vadd.f32 %v977, %v1248
        %v1250 = vpop.f32.mrb[0].mxu0
        %v1251 = vadd.f32 %v981, %v1250
        %v1252 = vpop.f32.mrb[0].mxu0
        %v1253 = vadd.f32 %v977, %v1252
        %v1254 = vpop.f32.mrb[0].mxu0
        %v1255 = vadd.f32 %v981, %v1254
        %1256 = vdwg.mxu0
        %1257 = vst [vmem:[%s305] sm:$0xff] %v1179
        %1258 = vst [vmem:[%s305 + $0x8] sm:$0xff] %v1181
        %1259 = vst [vmem:[%s305 + $0x10] sm:$0xff] %v1183
        %1260 = vst [vmem:[%s305 + $0x18] sm:$0xff] %v1185
        %1261 = vst [vmem:[%s305 + $0x20] sm:$0xff] %v1189
        %1262 = vst [vmem:[%s305 + $0x28] sm:$0xff] %v1191
        %1263 = vst [vmem:[%s305 + $0x30] sm:$0xff] %v1193
        %1264 = vst [vmem:[%s305 + $0x38] sm:$0xff] %v1195
        %1265 = vst [vmem:[%s305 + $0x40] sm:$0xff] %v1199
        %1266 = vst [vmem:[%s305 + $0x48] sm:$0xff] %v1201
        %1267 = vst [vmem:[%s305 + $0x50] sm:$0xff] %v1203
        %1268 = vst [vmem:[%s305 + $0x58] sm:$0xff] %v1205
        %1269 = vst [vmem:[%s305 + $0x60] sm:$0xff] %v1209
        %1270 = vst [vmem:[%s305 + $0x68] sm:$0xff] %v1211
        %1271 = vst [vmem:[%s305 + $0x70] sm:$0xff] %v1213
        %1272 = vst [vmem:[%s305 + $0x78] sm:$0xff] %v1215
        %1273 = vst [vmem:[%s305 + $0x80] sm:$0xff] %v1219
        %1274 = vst [vmem:[%s305 + $0x88] sm:$0xff] %v1221
        %1275 = vst [vmem:[%s305 + $0x90] sm:$0xff] %v1223
        %1276 = vst [vmem:[%s305 + $0x98] sm:$0xff] %v1225
        %1277 = vst [vmem:[%s305 + $0xa0] sm:$0xff] %v1229
        %1278 = vst [vmem:[%s305 + $0xa8] sm:$0xff] %v1231
        %1279 = vst [vmem:[%s305 + $0xb0] sm:$0xff] %v1233
        %1280 = vst [vmem:[%s305 + $0xb8] sm:$0xff] %v1235
        %1281 = vst [vmem:[%s305 + $0xc0] sm:$0xff] %v1239
        %1282 = vst [vmem:[%s305 + $0xc8] sm:$0xff] %v1241
        %1283 = vst [vmem:[%s305 + $0xd0] sm:$0xff] %v1243
        %1284 = vst [vmem:[%s305 + $0xd8] sm:$0xff] %v1245
        %1285 = vst [vmem:[%s305 + $0xe0] sm:$0xff] %v1249
        %1286 = vst [vmem:[%s305 + $0xe8] sm:$0xff] %v1251
        %1287 = vst [vmem:[%s305 + $0xf0] sm:$0xff] %v1253
        %1288 = vst [vmem:[%s305 + $0xf8] sm:$0xff] %v1255
        %s1289 = sand.u32 %s148, 1
        %s1290 = scalar_lea.sflag [#allocation7], %s1289
        %s1291 = sand.u32 %s148, 1
        %s1292 = smul.addr %s1291, 256
        %s1293 = scalar_lea.vmem [#allocation11], %s1292
        %s1294 = sand.u32 %s174, 1
        %s1295 = scalar_lea.sflag [#allocation13], %s1294
        %s1296 = sand.u32 %s174, 1
        %s1297 = smul.addr %s1296, 256
        %s1298 = scalar_lea.vmem [#allocation12], %s1297
        // Predicated region
        $region53: #{_forward_impl.1} parent=39 // pred_check
          %p1299 = pneg %p158
        $region54: #{_forward_impl.1} parent=39 // pred_check_branch
          %1301 = sbr.rel (%p1299) target = $region56
        $region55: #{_forward_impl.1} parent=39 // pred_region
          %s1302 = smul.u32 16, %s30
          %s1304 = ssub.s32 4096, 4096
          %1305 = vsyncadd %s1290, %s1304
          %s1306 = smul.addr %s1302, 2
          %s1307 = smul.addr %s1306, 128
          %s1308 = scalar_lea.hbm %s6, %s1307
          %s1309 = sshll.u32 %s1293, 4
          %s1310 = int_to_ptr.vmem [resolvable:$true] %s1309
          %1315 = dma.vmem_to_hbm [thread:$0]  %s1310, 4096, %s1308, %s1290, 256, 256, 16
        $region56: #{_forward_impl.1} parent=39 // pred_fallthru
          _
        // Predicated region
        $region57: #{_forward_impl.1} parent=39 // pred_check
          %p1316 = pneg %p184
        $region58: #{_forward_impl.1} parent=39 // pred_check_branch
          %1318 = sbr.rel (%p1316) target = $region60
        $region59: #{_forward_impl.1} parent=39 // pred_region
          %s1319 = smul.u32 16, %s30
          %s1321 = ssub.s32 4096, 4096
          %1322 = vsyncadd %s1295, %s1321
          %s1323 = smul.addr %s1319, 2
          %s1324 = smul.addr %s1323, 128
          %s1325 = scalar_lea.hbm %s7, %s1324
          %s1326 = sshll.u32 %s1298, 4
          %s1327 = int_to_ptr.vmem [resolvable:$true] %s1326
          %1332 = dma.vmem_to_hbm [thread:$0]  %s1327, 4096, %s1325, %s1295, 256, 256, 16
        $region60: #{_forward_impl.1} parent=39 // pred_fallthru
          _
      $region40: #{_forward_impl.1} parent=5 // pred_fallthru
        _
      %p1333 = scmp.le.s32.totalorder 2, %s25
      // Predicated region
      $region61: #{_forward_impl.1} parent=5 // pred_check
        %p1334 = pneg %p1333
      $region62: #{_forward_impl.1} parent=5 // pred_check_branch
        %1336 = sbr.rel (%p1334) target = $region64
      $region63: #{_forward_impl.1} parent=5 // pred_region
        %s1337 = ssub.s32 %s25, 2
        // Predicated region
        $region65: #{_forward_impl.1} parent=63 // pred_check
          %p1338 = pneg %p164
        $region66: #{_forward_impl.1} parent=63 // pred_check_branch
          %1340 = sbr.rel (%p1338) target = $region68
        $region67: #{_forward_impl.1} parent=63 // pred_region
          %s1341 = sand.u32 %s149, 1
          %s1342 = scalar_lea.sflag [#allocation7], %s1341
          %s1343 = sand.u32 %s149, 1
          %s1344 = smul.addr %s1343, 256
          %s1345 = scalar_lea.vmem [#allocation11], %s1344
          %1346 = dma.done %s1342, 4096
        $region68: #{_forward_impl.1} parent=63 // pred_fallthru
          _
        // Predicated region
        $region69: #{_forward_impl.1} parent=63 // pred_check
          %p1347 = pneg %p190
        $region70: #{_forward_impl.1} parent=63 // pred_check_branch
          %1349 = sbr.rel (%p1347) target = $region72
        $region71: #{_forward_impl.1} parent=63 // pred_region
          %s1350 = sand.u32 %s175, 1
          %s1351 = scalar_lea.sflag [#allocation13], %s1350
          %s1352 = sand.u32 %s175, 1
          %s1353 = smul.addr %s1352, 256
          %s1354 = scalar_lea.vmem [#allocation12], %s1353
          %1355 = dma.done %s1351, 4096
        $region72: #{_forward_impl.1} parent=63 // pred_fallthru
          _
      $region64: #{_forward_impl.1} parent=5 // pred_fallthru
        _
    $region6: #{_forward_impl.1} parent=1 // loop_footer
      %s29 = sadd.s32 1, %s25
    $region7: #{_forward_impl.1} parent=1 // loop_footer_branch
      %24 = sbr.rel target = $region3
    $region8: #{_forward_impl.1} parent=1 // loop_exit
      _
    %1356 = vsyncpa [#allocation6], 1
    %s1357 = scalar_lea.sflag [#allocation6], 1
    %1358 = vsyncpa %s1357, 1
    %1359 = vsyncpa [#allocation9], 1
    %1360 = vsyncpa [#allocation7], 1
    %s1361 = scalar_lea.sflag [#allocation7], 1
    %1362 = vsyncpa %s1361, 1
    %1363 = vsyncpa [#allocation13], 1
    %s1364 = scalar_lea.sflag [#allocation13], 1
    %1365 = vsyncpa %s1364, 1

</llo_original>
